<compile_context>
chip_gen: v7x
topology: tpu7x:2x2x1
jax: 0.10.0
libtpu: 0.0.40
codegen_flags: <defaults>
</compile_context>

<pallas_src>
import jax
import jax.numpy as jnp
from jax.experimental import pallas as pl
from jax.experimental.pallas import tpu as pltpu

INPUT_SIZE = 1
HIDDEN = 64            # logical hidden size (PyTorch)
HP = 128               # hidden padded to one full 128-lane vreg
NUM_CLASSES = 10
OUT_PAD = 128          # lane-dense output width (sliced back to 10 in wrapper)
SUBLANE = 8            # batch padding granularity
BATCH_BLOCK = 256      # batch rows per grid step (parallel axis; v7x megacore)

# Recurrent-matmul operand dtype.  bfloat16 = 1 MXU pass/step (f32 accumulate);
# set to jnp.float32 for bit-faithful parity with the f32 PyTorch module.
MATMUL_DTYPE = jnp.bfloat16


def _sigmoid(x):
    # sigmoid(x) == 0.5*tanh(0.5*x) + 0.5 : exactly one EUP (tanh) push per
    # vreg instead of a possible exp + divide lowering of jax.nn.sigmoid.
    return 0.5 * jnp.tanh(0.5 * x) + 0.5


def lstm_kernel(x_ref, w_ih_ref, w_hh_ref, b_ref, w_out_ref, b_out_ref, out_ref):
    """LSTM recurrence + final Linear for one batch block.

    x_ref     : (bm, T)        f32          -- INPUT_SIZE == 1, squeezed
    w_ih_ref  : (1, 4*HP)      f32          -- gate-block-padded input weights
    w_hh_ref  : (HP, 4*HP)     MATMUL_DTYPE -- gate-block-padded recurrent weights
    b_ref     : (1, 4*HP)      f32          -- b_ih + b_hh, gate-block-padded
    w_out_ref : (HP, OUT_PAD)  f32          -- padded Linear weight
    b_out_ref : (1, OUT_PAD)   f32          -- padded Linear bias
    out_ref   : (bm, OUT_PAD)  f32
    """
    x = x_ref[...]                       # (bm, T)
    w_ih = w_ih_ref[...]                 # (1, 4*HP)
    w_hh = w_hh_ref[...]                 # (HP, 4*HP), MATMUL_DTYPE
    b = b_ref[...]                       # (1, 4*HP)

    bsz, seq_len = x.shape

    # Hoisted, h-independent input projection for every step (VPU broadcast
    # multiply + fused bias; K == 1 so no MXU pass).  Off the serial chain:
    # the LLO scheduler overlaps it with the recurrence's MXU work.
    gx = [x[:, t:t + 1] * w_ih + b for t in range(seq_len)]

    h = jnp.zeros((bsz, HP), jnp.float32)
    c = jnp.zeros((bsz, HP), jnp.float32)

    # Scaling guard: the fully unrolled Python loop keeps h/c in vregs -- the
    # right choice for short T (<= ~16).  For much longer T switch to a
    # bounded-unroll lax.fori_loop over VMEM-resident gx to avoid vreg spills.
    #
    # TODO(synk): latch W_hh in the MXU weight-staging registers once
    # (pltpu.matmul_push_rhs) and drive matmul_acc_lhs/matmul_pop per step,
    # instead of jnp.dot re-streaming the 128x512 RHS every iteration.
    for t in range(seq_len):
        # Only the recurrent matmul is on the critical chain; operands in
        # MATMUL_DTYPE, accumulation in f32.
        gates = gx[t] + jnp.dot(h.astype(w_hh.dtype), w_hh,
                                preferred_element_type=jnp.float32)
        # PyTorch gate order [i, f, g, o]; each slice is a whole 128-lane vreg.
        i_g = _sigmoid(gates[:, 0 * HP:1 * HP])
        f_g = _sigmoid(gates[:, 1 * HP:2 * HP])
        g_g = jnp.tanh(gates[:, 2 * HP:3 * HP])
        o_g = _sigmoid(gates[:, 3 * HP:4 * HP])
        c = f_g * c + i_g * g_g
        h = o_g * jnp.tanh(c)

    # Final Linear on the last hidden state; lane-dense (bm, 128) store.
    out_ref[...] = (jnp.dot(h, w_out_ref[...], preferred_element_type=jnp.float32)
                    + b_out_ref[...])


def _pad_gate_cols(a):
    """(..., 4*HIDDEN) with gate blocks [i|f|g|o] -> (..., 4*HP): each gate
    block zero-padded HIDDEN -> HP so gate slices are vreg-aligned."""
    parts = jnp.split(a, 4, axis=-1)
    pad = [(0, 0)] * (a.ndim - 1) + [(0, HP - HIDDEN)]
    return jnp.concatenate([jnp.pad(p, pad) for p in parts], axis=-1)


def rnn_forward(x, params):
    """x: (B, T, INPUT_SIZE) float32 (PyTorch batch_first layout)."""
    B, T, in_size = x.shape
    assert in_size == INPUT_SIZE, "wrapper squeezes the size-1 feature dim"

    # Batch padding: at least one sublane (8); large batches tile into
    # BATCH_BLOCK-row grid steps on a parallel axis (v7x megacore split).
    bm = min(BATCH_BLOCK, max(SUBLANE, ((B + SUBLANE - 1) // SUBLANE) * SUBLANE))
    b_pad = ((B + bm - 1) // bm) * bm

    # (B, T, 1) -> (b_pad, T); padded batch rows are zero (their outputs are
    # discarded and batch rows never interact).
    x_p = jnp.pad(x.reshape(B, T), ((0, b_pad - B), (0, 0)))

    # Weight prep (fused under jit).  Padded hidden units have zero
    # weights & bias => they stay at h = c = 0 and never affect real units.
    w_ih_t = params["w_ih"].T                                  # (1, 4H)
    w_hh_t = params["w_hh"].T                                  # (H, 4H)
    bias = (params["b_ih"] + params["b_hh"]).reshape(1, -1)    # (1, 4H)

    w_ih_p = _pad_gate_cols(w_ih_t)                                        # (1, 4*HP)
    w_hh_p = jnp.pad(_pad_gate_cols(w_hh_t),
                     ((0, HP - HIDDEN), (0, 0))).astype(MATMUL_DTYPE)      # (HP, 4*HP)
    b_p = _pad_gate_cols(bias)                                             # (1, 4*HP)

    w_out_p = jnp.pad(params["w_out"].T,
                      ((0, HP - HIDDEN), (0, OUT_PAD - NUM_CLASSES)))      # (HP, OUT_PAD)
    b_out_p = jnp.pad(params["b_out"].reshape(1, -1),
                      ((0, 0), (0, OUT_PAD - NUM_CLASSES)))                # (1, OUT_PAD)

    full = lambda i: (0, 0)
    out_p = pl.pallas_call(
        lstm_kernel,
        out_shape=jax.ShapeDtypeStruct((b_pad, OUT_PAD), jnp.float32),
        grid=(b_pad // bm,),
        in_specs=[
            pl.BlockSpec((bm, T), lambda i: (i, 0)),
            pl.BlockSpec((1, 4 * HP), full),
            pl.BlockSpec((HP, 4 * HP), full),
            pl.BlockSpec((1, 4 * HP), full),
            pl.BlockSpec((HP, OUT_PAD), full),
            pl.BlockSpec((1, OUT_PAD), full),
        ],
        out_specs=pl.BlockSpec((bm, OUT_PAD), lambda i: (i, 0)),
        compiler_params=pltpu.CompilerParams(
            dimension_semantics=("parallel",)),
    )(x_p, w_ih_p, w_hh_p, b_p, w_out_p, b_out_p)

    return out_p[:B, :NUM_CLASSES]


def rnn_forward_ref(x, params, matmul_dtype=jnp.float32):
    """Pure-JAX reference matching the PyTorch forward pass.  With
    matmul_dtype=bfloat16 it mirrors the kernel's recurrent-matmul precision."""
    B, T, _ = x.shape
    h = jnp.zeros((B, HIDDEN), jnp.float32)
    c = jnp.zeros((B, HIDDEN), jnp.float32)
    b = params["b_ih"] + params["b_hh"]
    w_hh_t = params["w_hh"].T.astype(matmul_dtype)
    for t in range(T):
        gates = (x[:, t, :] @ params["w_ih"].T + b
                 + jnp.dot(h.astype(matmul_dtype), w_hh_t,
                           preferred_element_type=jnp.float32))
        i_g = jax.nn.sigmoid(gates[:, 0 * HIDDEN:1 * HIDDEN])
        f_g = jax.nn.sigmoid(gates[:, 1 * HIDDEN:2 * HIDDEN])
        g_g = jnp.tanh(gates[:, 2 * HIDDEN:3 * HIDDEN])
        o_g = jax.nn.sigmoid(gates[:, 3 * HIDDEN:4 * HIDDEN])
        c = f_g * c + i_g * g_g
        h = o_g * jnp.tanh(c)
    return h @ params["w_out"].T + params["b_out"]


def init_params(key):
    """Deterministic synthetic init matching PyTorch parameter shapes."""
    k = jax.random.split(key, 6)
    s = 1.0 / jnp.sqrt(HIDDEN)
    return {
        "w_ih": jax.random.uniform(k[0], (4 * HIDDEN, INPUT_SIZE), jnp.float32, -s, s),
        "w_hh": jax.random.uniform(k[1], (4 * HIDDEN, HIDDEN), jnp.float32, -s, s),
        "b_ih": jax.random.uniform(k[2], (4 * HIDDEN,), jnp.float32, -s, s),
        "b_hh": jax.random.uniform(k[3], (4 * HIDDEN,), jnp.float32, -s, s),
        "w_out": jax.random.uniform(k[4], (NUM_CLASSES, HIDDEN), jnp.float32, -s, s),
        "b_out": jax.random.uniform(k[5], (NUM_CLASSES,), jnp.float32, -s, s),
    }


if __name__ == "__main__":
    key = jax.random.PRNGKey(0)
    k_p, k_x = jax.random.split(key)
    params = init_params(k_p)

    B, T = 2, 8
    x = jax.random.normal(k_x, (B, T, INPUT_SIZE), jnp.float32)

    fwd = jax.jit(rnn_forward)   # amortizes weight padding / layout prep
    out = jax.block_until_ready(fwd(x, params))
    assert out.shape == (B, NUM_CLASSES)

    # Tight check: reference using the same recurrent-matmul precision as the
    # kernel (verifies the kernel itself).
    ref_matched = rnn_forward_ref(x, params, matmul_dtype=MATMUL_DTYPE)
    assert jnp.allclose(out, ref_matched, atol=2e-3, rtol=2e-3), (
        float(jnp.max(jnp.abs(out - ref_matched))))

    # Looser check against the exact-f32 (PyTorch-semantics) reference; slack
    # covers the bf16 recurrent matmul.
    ref_f32 = rnn_forward_ref(x, params, matmul_dtype=jnp.float32)
    tol = 1e-5 if MATMUL_DTYPE == jnp.float32 else 5e-2
    assert jnp.allclose(out, ref_f32, atol=tol, rtol=tol), (
        float(jnp.max(jnp.abs(out - ref_f32))))

    print("KERNEL_OK")
</pallas_src>

<mosaic_0001>
module attributes {stable_mosaic.version = 11 : i64} {
  func.func @lstm_kernel(%arg0: i32, %arg1: memref<8x8xf32, #tpu.memory_space<vmem>>, %arg2: memref<1x512xf32, #tpu.memory_space<vmem>>, %arg3: memref<128x512xbf16, #tpu.memory_space<vmem>>, %arg4: memref<1x512xf32, #tpu.memory_space<vmem>>, %arg5: memref<128x128xf32, #tpu.memory_space<vmem>>, %arg6: memref<1x128xf32, #tpu.memory_space<vmem>>, %arg7: memref<8x128xf32, #tpu.memory_space<vmem>>) attributes {dimension_semantics = [#tpu.dimension_semantics<parallel>], iteration_bounds = array<i64: 1>, scalar_prefetch = 0 : i64, scratch_operands = 0 : i64, tpu.core_type = #tpu.core_type<tc>, window_params = [{transform_indices = @transform_0, window_bounds = array<i64: 8, 8>}, {pipeline_mode = #tpu.pipeline_mode<synchronous>, transform_indices = @transform_1, window_bounds = array<i64: 1, 512>}, {pipeline_mode = #tpu.pipeline_mode<synchronous>, transform_indices = @transform_2, window_bounds = array<i64: 128, 512>}, {pipeline_mode = #tpu.pipeline_mode<synchronous>, transform_indices = @transform_3, window_bounds = array<i64: 1, 512>}, {pipeline_mode = #tpu.pipeline_mode<synchronous>, transform_indices = @transform_4, window_bounds = array<i64: 128, 128>}, {pipeline_mode = #tpu.pipeline_mode<synchronous>, transform_indices = @transform_5, window_bounds = array<i64: 1, 128>}, {transform_indices = @transform_6, window_bounds = array<i64: 8, 128>}]} {
    %c0 = arith.constant 0 : index
    %c0_0 = arith.constant 0 : index
    %0 = vector.load %arg1[%c0, %c0_0] : memref<8x8xf32, #tpu.memory_space<vmem>>, vector<8x8xf32>
    %c0_1 = arith.constant 0 : index
    %c0_2 = arith.constant 0 : index
    %1 = vector.load %arg2[%c0_1, %c0_2] : memref<1x512xf32, #tpu.memory_space<vmem>>, vector<1x512xf32>
    %c0_3 = arith.constant 0 : index
    %c0_4 = arith.constant 0 : index
    %2 = vector.load %arg3[%c0_3, %c0_4] : memref<128x512xbf16, #tpu.memory_space<vmem>>, vector<128x512xbf16>
    %c0_5 = arith.constant 0 : index
    %c0_6 = arith.constant 0 : index
    %3 = vector.load %arg4[%c0_5, %c0_6] : memref<1x512xf32, #tpu.memory_space<vmem>>, vector<1x512xf32>
    %4 = vector.extract_strided_slice %0 {offsets = [0, 0], sizes = [8, 1], strides = [1, 1]} : vector<8x8xf32> to vector<8x1xf32>
    %5 = vector.broadcast %4 : vector<8x1xf32> to vector<8x512xf32>
    %6 = vector.broadcast %1 : vector<1x512xf32> to vector<8x512xf32>
    %7 = arith.mulf %5, %6 : vector<8x512xf32>
    %8 = vector.broadcast %3 : vector<1x512xf32> to vector<8x512xf32>
    %9 = arith.addf %7, %8 : vector<8x512xf32>
    %10 = vector.extract_strided_slice %0 {offsets = [0, 1], sizes = [8, 1], strides = [1, 1]} : vector<8x8xf32> to vector<8x1xf32>
    %11 = vector.broadcast %10 : vector<8x1xf32> to vector<8x512xf32>
    %12 = vector.broadcast %1 : vector<1x512xf32> to vector<8x512xf32>
    %13 = arith.mulf %11, %12 : vector<8x512xf32>
    %14 = vector.broadcast %3 : vector<1x512xf32> to vector<8x512xf32>
    %15 = arith.addf %13, %14 : vector<8x512xf32>
    %16 = vector.extract_strided_slice %0 {offsets = [0, 2], sizes = [8, 1], strides = [1, 1]} : vector<8x8xf32> to vector<8x1xf32>
    %17 = vector.broadcast %16 : vector<8x1xf32> to vector<8x512xf32>
    %18 = vector.broadcast %1 : vector<1x512xf32> to vector<8x512xf32>
    %19 = arith.mulf %17, %18 : vector<8x512xf32>
    %20 = vector.broadcast %3 : vector<1x512xf32> to vector<8x512xf32>
    %21 = arith.addf %19, %20 : vector<8x512xf32>
    %22 = vector.extract_strided_slice %0 {offsets = [0, 3], sizes = [8, 1], strides = [1, 1]} : vector<8x8xf32> to vector<8x1xf32>
    %23 = vector.broadcast %22 : vector<8x1xf32> to vector<8x512xf32>
    %24 = vector.broadcast %1 : vector<1x512xf32> to vector<8x512xf32>
    %25 = arith.mulf %23, %24 : vector<8x512xf32>
    %26 = vector.broadcast %3 : vector<1x512xf32> to vector<8x512xf32>
    %27 = arith.addf %25, %26 : vector<8x512xf32>
    %28 = vector.extract_strided_slice %0 {offsets = [0, 4], sizes = [8, 1], strides = [1, 1]} : vector<8x8xf32> to vector<8x1xf32>
    %29 = vector.broadcast %28 : vector<8x1xf32> to vector<8x512xf32>
    %30 = vector.broadcast %1 : vector<1x512xf32> to vector<8x512xf32>
    %31 = arith.mulf %29, %30 : vector<8x512xf32>
    %32 = vector.broadcast %3 : vector<1x512xf32> to vector<8x512xf32>
    %33 = arith.addf %31, %32 : vector<8x512xf32>
    %34 = vector.extract_strided_slice %0 {offsets = [0, 5], sizes = [8, 1], strides = [1, 1]} : vector<8x8xf32> to vector<8x1xf32>
    %35 = vector.broadcast %34 : vector<8x1xf32> to vector<8x512xf32>
    %36 = vector.broadcast %1 : vector<1x512xf32> to vector<8x512xf32>
    %37 = arith.mulf %35, %36 : vector<8x512xf32>
    %38 = vector.broadcast %3 : vector<1x512xf32> to vector<8x512xf32>
    %39 = arith.addf %37, %38 : vector<8x512xf32>
    %40 = vector.extract_strided_slice %0 {offsets = [0, 6], sizes = [8, 1], strides = [1, 1]} : vector<8x8xf32> to vector<8x1xf32>
    %41 = vector.broadcast %40 : vector<8x1xf32> to vector<8x512xf32>
    %42 = vector.broadcast %1 : vector<1x512xf32> to vector<8x512xf32>
    %43 = arith.mulf %41, %42 : vector<8x512xf32>
    %44 = vector.broadcast %3 : vector<1x512xf32> to vector<8x512xf32>
    %45 = arith.addf %43, %44 : vector<8x512xf32>
    %46 = vector.extract_strided_slice %0 {offsets = [0, 7], sizes = [8, 1], strides = [1, 1]} : vector<8x8xf32> to vector<8x1xf32>
    %47 = vector.broadcast %46 : vector<8x1xf32> to vector<8x512xf32>
    %48 = vector.broadcast %1 : vector<1x512xf32> to vector<8x512xf32>
    %49 = arith.mulf %47, %48 : vector<8x512xf32>
    %50 = vector.broadcast %3 : vector<1x512xf32> to vector<8x512xf32>
    %51 = arith.addf %49, %50 : vector<8x512xf32>
    %cst = arith.constant 0.000000e+00 : f32
    %52 = vector.broadcast %cst : f32 to vector<8x128xf32>
    %cst_7 = arith.constant 0.000000e+00 : f32
    %53 = vector.broadcast %cst_7 : f32 to vector<8x128xf32>
    %54 = arith.truncf %52 : vector<8x128xf32> to vector<8x128xbf16>
    %cst_8 = arith.constant dense<0.000000e+00> : vector<8x512xf32>
    %55 = tpu.matmul %54, %2, %cst_8 {dimension_numbers = #tpu.dot_dimension_numbers<[1], [0], [0], [1], [0, 0, 1, 1], [], []>} : vector<8x128xbf16>, vector<128x512xbf16>, vector<8x512xf32> -> vector<8x512xf32>
    %56 = arith.addf %9, %55 : vector<8x512xf32>
    %57 = vector.extract_strided_slice %56 {offsets = [0, 0], sizes = [8, 128], strides = [1, 1]} : vector<8x512xf32> to vector<8x128xf32>
    %cst_9 = arith.constant 5.000000e-01 : f32
    %58 = vector.broadcast %cst_9 : f32 to vector<8x128xf32>
    %59 = arith.mulf %58, %57 : vector<8x128xf32>
    %60 = math.tanh %59 : vector<8x128xf32>
    %cst_10 = arith.constant 5.000000e-01 : f32
    %61 = vector.broadcast %cst_10 : f32 to vector<8x128xf32>
    %62 = arith.mulf %61, %60 : vector<8x128xf32>
    %cst_11 = arith.constant 5.000000e-01 : f32
    %63 = vector.broadcast %cst_11 : f32 to vector<8x128xf32>
    %64 = arith.addf %62, %63 : vector<8x128xf32>
    %65 = vector.extract_strided_slice %56 {offsets = [0, 128], sizes = [8, 128], strides = [1, 1]} : vector<8x512xf32> to vector<8x128xf32>
    %cst_12 = arith.constant 5.000000e-01 : f32
    %66 = vector.broadcast %cst_12 : f32 to vector<8x128xf32>
    %67 = arith.mulf %66, %65 : vector<8x128xf32>
    %68 = math.tanh %67 : vector<8x128xf32>
    %cst_13 = arith.constant 5.000000e-01 : f32
    %69 = vector.broadcast %cst_13 : f32 to vector<8x128xf32>
    %70 = arith.mulf %69, %68 : vector<8x128xf32>
    %cst_14 = arith.constant 5.000000e-01 : f32
    %71 = vector.broadcast %cst_14 : f32 to vector<8x128xf32>
    %72 = arith.addf %70, %71 : vector<8x128xf32>
    %73 = vector.extract_strided_slice %56 {offsets = [0, 256], sizes = [8, 128], strides = [1, 1]} : vector<8x512xf32> to vector<8x128xf32>
    %74 = math.tanh %73 : vector<8x128xf32>
    %75 = vector.extract_strided_slice %56 {offsets = [0, 384], sizes = [8, 128], strides = [1, 1]} : vector<8x512xf32> to vector<8x128xf32>
    %cst_15 = arith.constant 5.000000e-01 : f32
    %76 = vector.broadcast %cst_15 : f32 to vector<8x128xf32>
    %77 = arith.mulf %76, %75 : vector<8x128xf32>
    %78 = math.tanh %77 : vector<8x128xf32>
    %cst_16 = arith.constant 5.000000e-01 : f32
    %79 = vector.broadcast %cst_16 : f32 to vector<8x128xf32>
    %80 = arith.mulf %79, %78 : vector<8x128xf32>
    %cst_17 = arith.constant 5.000000e-01 : f32
    %81 = vector.broadcast %cst_17 : f32 to vector<8x128xf32>
    %82 = arith.addf %80, %81 : vector<8x128xf32>
    %83 = arith.mulf %72, %53 : vector<8x128xf32>
    %84 = arith.mulf %64, %74 : vector<8x128xf32>
    %85 = arith.addf %83, %84 : vector<8x128xf32>
    %86 = math.tanh %85 : vector<8x128xf32>
    %87 = arith.mulf %82, %86 : vector<8x128xf32>
    %88 = arith.truncf %87 : vector<8x128xf32> to vector<8x128xbf16>
    %cst_18 = arith.constant dense<0.000000e+00> : vector<8x512xf32>
    %89 = tpu.matmul %88, %2, %cst_18 {dimension_numbers = #tpu.dot_dimension_numbers<[1], [0], [0], [1], [0, 0, 1, 1], [], []>} : vector<8x128xbf16>, vector<128x512xbf16>, vector<8x512xf32> -> vector<8x512xf32>
    %90 = arith.addf %15, %89 : vector<8x512xf32>
    %91 = vector.extract_strided_slice %90 {offsets = [0, 0], sizes = [8, 128], strides = [1, 1]} : vector<8x512xf32> to vector<8x128xf32>
    %cst_19 = arith.constant 5.000000e-01 : f32
    %92 = vector.broadcast %cst_19 : f32 to vector<8x128xf32>
    %93 = arith.mulf %92, %91 : vector<8x128xf32>
    %94 = math.tanh %93 : vector<8x128xf32>
    %cst_20 = arith.constant 5.000000e-01 : f32
    %95 = vector.broadcast %cst_20 : f32 to vector<8x128xf32>
    %96 = arith.mulf %95, %94 : vector<8x128xf32>
    %cst_21 = arith.constant 5.000000e-01 : f32
    %97 = vector.broadcast %cst_21 : f32 to vector<8x128xf32>
    %98 = arith.addf %96, %97 : vector<8x128xf32>
    %99 = vector.extract_strided_slice %90 {offsets = [0, 128], sizes = [8, 128], strides = [1, 1]} : vector<8x512xf32> to vector<8x128xf32>
    %cst_22 = arith.constant 5.000000e-01 : f32
    %100 = vector.broadcast %cst_22 : f32 to vector<8x128xf32>
    %101 = arith.mulf %100, %99 : vector<8x128xf32>
    %102 = math.tanh %101 : vector<8x128xf32>
    %cst_23 = arith.constant 5.000000e-01 : f32
    %103 = vector.broadcast %cst_23 : f32 to vector<8x128xf32>
    %104 = arith.mulf %103, %102 : vector<8x128xf32>
    %cst_24 = arith.constant 5.000000e-01 : f32
    %105 = vector.broadcast %cst_24 : f32 to vector<8x128xf32>
    %106 = arith.addf %104, %105 : vector<8x128xf32>
    %107 = vector.extract_strided_slice %90 {offsets = [0, 256], sizes = [8, 128], strides = [1, 1]} : vector<8x512xf32> to vector<8x128xf32>
    %108 = math.tanh %107 : vector<8x128xf32>
    %109 = vector.extract_strided_slice %90 {offsets = [0, 384], sizes = [8, 128], strides = [1, 1]} : vector<8x512xf32> to vector<8x128xf32>
    %cst_25 = arith.constant 5.000000e-01 : f32
    %110 = vector.broadcast %cst_25 : f32 to vector<8x128xf32>
    %111 = arith.mulf %110, %109 : vector<8x128xf32>
    %112 = math.tanh %111 : vector<8x128xf32>
    %cst_26 = arith.constant 5.000000e-01 : f32
    %113 = vector.broadcast %cst_26 : f32 to vector<8x128xf32>
    %114 = arith.mulf %113, %112 : vector<8x128xf32>
    %cst_27 = arith.constant 5.000000e-01 : f32
    %115 = vector.broadcast %cst_27 : f32 to vector<8x128xf32>
    %116 = arith.addf %114, %115 : vector<8x128xf32>
    %117 = arith.mulf %106, %85 : vector<8x128xf32>
    %118 = arith.mulf %98, %108 : vector<8x128xf32>
    %119 = arith.addf %117, %118 : vector<8x128xf32>
    %120 = math.tanh %119 : vector<8x128xf32>
    %121 = arith.mulf %116, %120 : vector<8x128xf32>
    %122 = arith.truncf %121 : vector<8x128xf32> to vector<8x128xbf16>
    %cst_28 = arith.constant dense<0.000000e+00> : vector<8x512xf32>
    %123 = tpu.matmul %122, %2, %cst_28 {dimension_numbers = #tpu.dot_dimension_numbers<[1], [0], [0], [1], [0, 0, 1, 1], [], []>} : vector<8x128xbf16>, vector<128x512xbf16>, vector<8x512xf32> -> vector<8x512xf32>
    %124 = arith.addf %21, %123 : vector<8x512xf32>
    %125 = vector.extract_strided_slice %124 {offsets = [0, 0], sizes = [8, 128], strides = [1, 1]} : vector<8x512xf32> to vector<8x128xf32>
    %cst_29 = arith.constant 5.000000e-01 : f32
    %126 = vector.broadcast %cst_29 : f32 to vector<8x128xf32>
    %127 = arith.mulf %126, %125 : vector<8x128xf32>
    %128 = math.tanh %127 : vector<8x128xf32>
    %cst_30 = arith.constant 5.000000e-01 : f32
    %129 = vector.broadcast %cst_30 : f32 to vector<8x128xf32>
    %130 = arith.mulf %129, %128 : vector<8x128xf32>
    %cst_31 = arith.constant 5.000000e-01 : f32
    %131 = vector.broadcast %cst_31 : f32 to vector<8x128xf32>
    %132 = arith.addf %130, %131 : vector<8x128xf32>
    %133 = vector.extract_strided_slice %124 {offsets = [0, 128], sizes = [8, 128], strides = [1, 1]} : vector<8x512xf32> to vector<8x128xf32>
    %cst_32 = arith.constant 5.000000e-01 : f32
    %134 = vector.broadcast %cst_32 : f32 to vector<8x128xf32>
    %135 = arith.mulf %134, %133 : vector<8x128xf32>
    %136 = math.tanh %135 : vector<8x128xf32>
    %cst_33 = arith.constant 5.000000e-01 : f32
    %137 = vector.broadcast %cst_33 : f32 to vector<8x128xf32>
    %138 = arith.mulf %137, %136 : vector<8x128xf32>
    %cst_34 = arith.constant 5.000000e-01 : f32
    %139 = vector.broadcast %cst_34 : f32 to vector<8x128xf32>
    %140 = arith.addf %138, %139 : vector<8x128xf32>
    %141 = vector.extract_strided_slice %124 {offsets = [0, 256], sizes = [8, 128], strides = [1, 1]} : vector<8x512xf32> to vector<8x128xf32>
    %142 = math.tanh %141 : vector<8x128xf32>
    %143 = vector.extract_strided_slice %124 {offsets = [0, 384], sizes = [8, 128], strides = [1, 1]} : vector<8x512xf32> to vector<8x128xf32>
    %cst_35 = arith.constant 5.000000e-01 : f32
    %144 = vector.broadcast %cst_35 : f32 to vector<8x128xf32>
    %145 = arith.mulf %144, %143 : vector<8x128xf32>
    %146 = math.tanh %145 : vector<8x128xf32>
    %cst_36 = arith.constant 5.000000e-01 : f32
    %147 = vector.broadcast %cst_36 : f32 to vector<8x128xf32>
    %148 = arith.mulf %147, %146 : vector<8x128xf32>
    %cst_37 = arith.constant 5.000000e-01 : f32
    %149 = vector.broadcast %cst_37 : f32 to vector<8x128xf32>
    %150 = arith.addf %148, %149 : vector<8x128xf32>
    %151 = arith.mulf %140, %119 : vector<8x128xf32>
    %152 = arith.mulf %132, %142 : vector<8x128xf32>
    %153 = arith.addf %151, %152 : vector<8x128xf32>
    %154 = math.tanh %153 : vector<8x128xf32>
    %155 = arith.mulf %150, %154 : vector<8x128xf32>
    %156 = arith.truncf %155 : vector<8x128xf32> to vector<8x128xbf16>
    %cst_38 = arith.constant dense<0.000000e+00> : vector<8x512xf32>
    %157 = tpu.matmul %156, %2, %cst_38 {dimension_numbers = #tpu.dot_dimension_numbers<[1], [0], [0], [1], [0, 0, 1, 1], [], []>} : vector<8x128xbf16>, vector<128x512xbf16>, vector<8x512xf32> -> vector<8x512xf32>
    %158 = arith.addf %27, %157 : vector<8x512xf32>
    %159 = vector.extract_strided_slice %158 {offsets = [0, 0], sizes = [8, 128], strides = [1, 1]} : vector<8x512xf32> to vector<8x128xf32>
    %cst_39 = arith.constant 5.000000e-01 : f32
    %160 = vector.broadcast %cst_39 : f32 to vector<8x128xf32>
    %161 = arith.mulf %160, %159 : vector<8x128xf32>
    %162 = math.tanh %161 : vector<8x128xf32>
    %cst_40 = arith.constant 5.000000e-01 : f32
    %163 = vector.broadcast %cst_40 : f32 to vector<8x128xf32>
    %164 = arith.mulf %163, %162 : vector<8x128xf32>
    %cst_41 = arith.constant 5.000000e-01 : f32
    %165 = vector.broadcast %cst_41 : f32 to vector<8x128xf32>
    %166 = arith.addf %164, %165 : vector<8x128xf32>
    %167 = vector.extract_strided_slice %158 {offsets = [0, 128], sizes = [8, 128], strides = [1, 1]} : vector<8x512xf32> to vector<8x128xf32>
    %cst_42 = arith.constant 5.000000e-01 : f32
    %168 = vector.broadcast %cst_42 : f32 to vector<8x128xf32>
    %169 = arith.mulf %168, %167 : vector<8x128xf32>
    %170 = math.tanh %169 : vector<8x128xf32>
    %cst_43 = arith.constant 5.000000e-01 : f32
    %171 = vector.broadcast %cst_43 : f32 to vector<8x128xf32>
    %172 = arith.mulf %171, %170 : vector<8x128xf32>
    %cst_44 = arith.constant 5.000000e-01 : f32
    %173 = vector.broadcast %cst_44 : f32 to vector<8x128xf32>
    %174 = arith.addf %172, %173 : vector<8x128xf32>
    %175 = vector.extract_strided_slice %158 {offsets = [0, 256], sizes = [8, 128], strides = [1, 1]} : vector<8x512xf32> to vector<8x128xf32>
    %176 = math.tanh %175 : vector<8x128xf32>
    %177 = vector.extract_strided_slice %158 {offsets = [0, 384], sizes = [8, 128], strides = [1, 1]} : vector<8x512xf32> to vector<8x128xf32>
    %cst_45 = arith.constant 5.000000e-01 : f32
    %178 = vector.broadcast %cst_45 : f32 to vector<8x128xf32>
    %179 = arith.mulf %178, %177 : vector<8x128xf32>
    %180 = math.tanh %179 : vector<8x128xf32>
    %cst_46 = arith.constant 5.000000e-01 : f32
    %181 = vector.broadcast %cst_46 : f32 to vector<8x128xf32>
    %182 = arith.mulf %181, %180 : vector<8x128xf32>
    %cst_47 = arith.constant 5.000000e-01 : f32
    %183 = vector.broadcast %cst_47 : f32 to vector<8x128xf32>
    %184 = arith.addf %182, %183 : vector<8x128xf32>
    %185 = arith.mulf %174, %153 : vector<8x128xf32>
    %186 = arith.mulf %166, %176 : vector<8x128xf32>
    %187 = arith.addf %185, %186 : vector<8x128xf32>
    %188 = math.tanh %187 : vector<8x128xf32>
    %189 = arith.mulf %184, %188 : vector<8x128xf32>
    %190 = arith.truncf %189 : vector<8x128xf32> to vector<8x128xbf16>
    %cst_48 = arith.constant dense<0.000000e+00> : vector<8x512xf32>
    %191 = tpu.matmul %190, %2, %cst_48 {dimension_numbers = #tpu.dot_dimension_numbers<[1], [0], [0], [1], [0, 0, 1, 1], [], []>} : vector<8x128xbf16>, vector<128x512xbf16>, vector<8x512xf32> -> vector<8x512xf32>
    %192 = arith.addf %33, %191 : vector<8x512xf32>
    %193 = vector.extract_strided_slice %192 {offsets = [0, 0], sizes = [8, 128], strides = [1, 1]} : vector<8x512xf32> to vector<8x128xf32>
    %cst_49 = arith.constant 5.000000e-01 : f32
    %194 = vector.broadcast %cst_49 : f32 to vector<8x128xf32>
    %195 = arith.mulf %194, %193 : vector<8x128xf32>
    %196 = math.tanh %195 : vector<8x128xf32>
    %cst_50 = arith.constant 5.000000e-01 : f32
    %197 = vector.broadcast %cst_50 : f32 to vector<8x128xf32>
    %198 = arith.mulf %197, %196 : vector<8x128xf32>
    %cst_51 = arith.constant 5.000000e-01 : f32
    %199 = vector.broadcast %cst_51 : f32 to vector<8x128xf32>
    %200 = arith.addf %198, %199 : vector<8x128xf32>
    %201 = vector.extract_strided_slice %192 {offsets = [0, 128], sizes = [8, 128], strides = [1, 1]} : vector<8x512xf32> to vector<8x128xf32>
    %cst_52 = arith.constant 5.000000e-01 : f32
    %202 = vector.broadcast %cst_52 : f32 to vector<8x128xf32>
    %203 = arith.mulf %202, %201 : vector<8x128xf32>
    %204 = math.tanh %203 : vector<8x128xf32>
    %cst_53 = arith.constant 5.000000e-01 : f32
    %205 = vector.broadcast %cst_53 : f32 to vector<8x128xf32>
    %206 = arith.mulf %205, %204 : vector<8x128xf32>
    %cst_54 = arith.constant 5.000000e-01 : f32
    %207 = vector.broadcast %cst_54 : f32 to vector<8x128xf32>
    %208 = arith.addf %206, %207 : vector<8x128xf32>
    %209 = vector.extract_strided_slice %192 {offsets = [0, 256], sizes = [8, 128], strides = [1, 1]} : vector<8x512xf32> to vector<8x128xf32>
    %210 = math.tanh %209 : vector<8x128xf32>
    %211 = vector.extract_strided_slice %192 {offsets = [0, 384], sizes = [8, 128], strides = [1, 1]} : vector<8x512xf32> to vector<8x128xf32>
    %cst_55 = arith.constant 5.000000e-01 : f32
    %212 = vector.broadcast %cst_55 : f32 to vector<8x128xf32>
    %213 = arith.mulf %212, %211 : vector<8x128xf32>
    %214 = math.tanh %213 : vector<8x128xf32>
    %cst_56 = arith.constant 5.000000e-01 : f32
    %215 = vector.broadcast %cst_56 : f32 to vector<8x128xf32>
    %216 = arith.mulf %215, %214 : vector<8x128xf32>
    %cst_57 = arith.constant 5.000000e-01 : f32
    %217 = vector.broadcast %cst_57 : f32 to vector<8x128xf32>
    %218 = arith.addf %216, %217 : vector<8x128xf32>
    %219 = arith.mulf %208, %187 : vector<8x128xf32>
    %220 = arith.mulf %200, %210 : vector<8x128xf32>
    %221 = arith.addf %219, %220 : vector<8x128xf32>
    %222 = math.tanh %221 : vector<8x128xf32>
    %223 = arith.mulf %218, %222 : vector<8x128xf32>
    %224 = arith.truncf %223 : vector<8x128xf32> to vector<8x128xbf16>
    %cst_58 = arith.constant dense<0.000000e+00> : vector<8x512xf32>
    %225 = tpu.matmul %224, %2, %cst_58 {dimension_numbers = #tpu.dot_dimension_numbers<[1], [0], [0], [1], [0, 0, 1, 1], [], []>} : vector<8x128xbf16>, vector<128x512xbf16>, vector<8x512xf32> -> vector<8x512xf32>
    %226 = arith.addf %39, %225 : vector<8x512xf32>
    %227 = vector.extract_strided_slice %226 {offsets = [0, 0], sizes = [8, 128], strides = [1, 1]} : vector<8x512xf32> to vector<8x128xf32>
    %cst_59 = arith.constant 5.000000e-01 : f32
    %228 = vector.broadcast %cst_59 : f32 to vector<8x128xf32>
    %229 = arith.mulf %228, %227 : vector<8x128xf32>
    %230 = math.tanh %229 : vector<8x128xf32>
    %cst_60 = arith.constant 5.000000e-01 : f32
    %231 = vector.broadcast %cst_60 : f32 to vector<8x128xf32>
    %232 = arith.mulf %231, %230 : vector<8x128xf32>
    %cst_61 = arith.constant 5.000000e-01 : f32
    %233 = vector.broadcast %cst_61 : f32 to vector<8x128xf32>
    %234 = arith.addf %232, %233 : vector<8x128xf32>
    %235 = vector.extract_strided_slice %226 {offsets = [0, 128], sizes = [8, 128], strides = [1, 1]} : vector<8x512xf32> to vector<8x128xf32>
    %cst_62 = arith.constant 5.000000e-01 : f32
    %236 = vector.broadcast %cst_62 : f32 to vector<8x128xf32>
    %237 = arith.mulf %236, %235 : vector<8x128xf32>
    %238 = math.tanh %237 : vector<8x128xf32>
    %cst_63 = arith.constant 5.000000e-01 : f32
    %239 = vector.broadcast %cst_63 : f32 to vector<8x128xf32>
    %240 = arith.mulf %239, %238 : vector<8x128xf32>
    %cst_64 = arith.constant 5.000000e-01 : f32
    %241 = vector.broadcast %cst_64 : f32 to vector<8x128xf32>
    %242 = arith.addf %240, %241 : vector<8x128xf32>
    %243 = vector.extract_strided_slice %226 {offsets = [0, 256], sizes = [8, 128], strides = [1, 1]} : vector<8x512xf32> to vector<8x128xf32>
    %244 = math.tanh %243 : vector<8x128xf32>
    %245 = vector.extract_strided_slice %226 {offsets = [0, 384], sizes = [8, 128], strides = [1, 1]} : vector<8x512xf32> to vector<8x128xf32>
    %cst_65 = arith.constant 5.000000e-01 : f32
    %246 = vector.broadcast %cst_65 : f32 to vector<8x128xf32>
    %247 = arith.mulf %246, %245 : vector<8x128xf32>
    %248 = math.tanh %247 : vector<8x128xf32>
    %cst_66 = arith.constant 5.000000e-01 : f32
    %249 = vector.broadcast %cst_66 : f32 to vector<8x128xf32>
    %250 = arith.mulf %249, %248 : vector<8x128xf32>
    %cst_67 = arith.constant 5.000000e-01 : f32
    %251 = vector.broadcast %cst_67 : f32 to vector<8x128xf32>
    %252 = arith.addf %250, %251 : vector<8x128xf32>
    %253 = arith.mulf %242, %221 : vector<8x128xf32>
    %254 = arith.mulf %234, %244 : vector<8x128xf32>
    %255 = arith.addf %253, %254 : vector<8x128xf32>
    %256 = math.tanh %255 : vector<8x128xf32>
    %257 = arith.mulf %252, %256 : vector<8x128xf32>
    %258 = arith.truncf %257 : vector<8x128xf32> to vector<8x128xbf16>
    %cst_68 = arith.constant dense<0.000000e+00> : vector<8x512xf32>
    %259 = tpu.matmul %258, %2, %cst_68 {dimension_numbers = #tpu.dot_dimension_numbers<[1], [0], [0], [1], [0, 0, 1, 1], [], []>} : vector<8x128xbf16>, vector<128x512xbf16>, vector<8x512xf32> -> vector<8x512xf32>
    %260 = arith.addf %45, %259 : vector<8x512xf32>
    %261 = vector.extract_strided_slice %260 {offsets = [0, 0], sizes = [8, 128], strides = [1, 1]} : vector<8x512xf32> to vector<8x128xf32>
    %cst_69 = arith.constant 5.000000e-01 : f32
    %262 = vector.broadcast %cst_69 : f32 to vector<8x128xf32>
    %263 = arith.mulf %262, %261 : vector<8x128xf32>
    %264 = math.tanh %263 : vector<8x128xf32>
    %cst_70 = arith.constant 5.000000e-01 : f32
    %265 = vector.broadcast %cst_70 : f32 to vector<8x128xf32>
    %266 = arith.mulf %265, %264 : vector<8x128xf32>
    %cst_71 = arith.constant 5.000000e-01 : f32
    %267 = vector.broadcast %cst_71 : f32 to vector<8x128xf32>
    %268 = arith.addf %266, %267 : vector<8x128xf32>
    %269 = vector.extract_strided_slice %260 {offsets = [0, 128], sizes = [8, 128], strides = [1, 1]} : vector<8x512xf32> to vector<8x128xf32>
    %cst_72 = arith.constant 5.000000e-01 : f32
    %270 = vector.broadcast %cst_72 : f32 to vector<8x128xf32>
    %271 = arith.mulf %270, %269 : vector<8x128xf32>
    %272 = math.tanh %271 : vector<8x128xf32>
    %cst_73 = arith.constant 5.000000e-01 : f32
    %273 = vector.broadcast %cst_73 : f32 to vector<8x128xf32>
    %274 = arith.mulf %273, %272 : vector<8x128xf32>
    %cst_74 = arith.constant 5.000000e-01 : f32
    %275 = vector.broadcast %cst_74 : f32 to vector<8x128xf32>
    %276 = arith.addf %274, %275 : vector<8x128xf32>
    %277 = vector.extract_strided_slice %260 {offsets = [0, 256], sizes = [8, 128], strides = [1, 1]} : vector<8x512xf32> to vector<8x128xf32>
    %278 = math.tanh %277 : vector<8x128xf32>
    %279 = vector.extract_strided_slice %260 {offsets = [0, 384], sizes = [8, 128], strides = [1, 1]} : vector<8x512xf32> to vector<8x128xf32>
    %cst_75 = arith.constant 5.000000e-01 : f32
    %280 = vector.broadcast %cst_75 : f32 to vector<8x128xf32>
    %281 = arith.mulf %280, %279 : vector<8x128xf32>
    %282 = math.tanh %281 : vector<8x128xf32>
    %cst_76 = arith.constant 5.000000e-01 : f32
    %283 = vector.broadcast %cst_76 : f32 to vector<8x128xf32>
    %284 = arith.mulf %283, %282 : vector<8x128xf32>
    %cst_77 = arith.constant 5.000000e-01 : f32
    %285 = vector.broadcast %cst_77 : f32 to vector<8x128xf32>
    %286 = arith.addf %284, %285 : vector<8x128xf32>
    %287 = arith.mulf %276, %255 : vector<8x128xf32>
    %288 = arith.mulf %268, %278 : vector<8x128xf32>
    %289 = arith.addf %287, %288 : vector<8x128xf32>
    %290 = math.tanh %289 : vector<8x128xf32>
    %291 = arith.mulf %286, %290 : vector<8x128xf32>
    %292 = arith.truncf %291 : vector<8x128xf32> to vector<8x128xbf16>
    %cst_78 = arith.constant dense<0.000000e+00> : vector<8x512xf32>
    %293 = tpu.matmul %292, %2, %cst_78 {dimension_numbers = #tpu.dot_dimension_numbers<[1], [0], [0], [1], [0, 0, 1, 1], [], []>} : vector<8x128xbf16>, vector<128x512xbf16>, vector<8x512xf32> -> vector<8x512xf32>
    %294 = arith.addf %51, %293 : vector<8x512xf32>
    %295 = vector.extract_strided_slice %294 {offsets = [0, 0], sizes = [8, 128], strides = [1, 1]} : vector<8x512xf32> to vector<8x128xf32>
    %cst_79 = arith.constant 5.000000e-01 : f32
    %296 = vector.broadcast %cst_79 : f32 to vector<8x128xf32>
    %297 = arith.mulf %296, %295 : vector<8x128xf32>
    %298 = math.tanh %297 : vector<8x128xf32>
    %cst_80 = arith.constant 5.000000e-01 : f32
    %299 = vector.broadcast %cst_80 : f32 to vector<8x128xf32>
    %300 = arith.mulf %299, %298 : vector<8x128xf32>
    %cst_81 = arith.constant 5.000000e-01 : f32
    %301 = vector.broadcast %cst_81 : f32 to vector<8x128xf32>
    %302 = arith.addf %300, %301 : vector<8x128xf32>
    %303 = vector.extract_strided_slice %294 {offsets = [0, 128], sizes = [8, 128], strides = [1, 1]} : vector<8x512xf32> to vector<8x128xf32>
    %cst_82 = arith.constant 5.000000e-01 : f32
    %304 = vector.broadcast %cst_82 : f32 to vector<8x128xf32>
    %305 = arith.mulf %304, %303 : vector<8x128xf32>
    %306 = math.tanh %305 : vector<8x128xf32>
    %cst_83 = arith.constant 5.000000e-01 : f32
    %307 = vector.broadcast %cst_83 : f32 to vector<8x128xf32>
    %308 = arith.mulf %307, %306 : vector<8x128xf32>
    %cst_84 = arith.constant 5.000000e-01 : f32
    %309 = vector.broadcast %cst_84 : f32 to vector<8x128xf32>
    %310 = arith.addf %308, %309 : vector<8x128xf32>
    %311 = vector.extract_strided_slice %294 {offsets = [0, 256], sizes = [8, 128], strides = [1, 1]} : vector<8x512xf32> to vector<8x128xf32>
    %312 = math.tanh %311 : vector<8x128xf32>
    %313 = vector.extract_strided_slice %294 {offsets = [0, 384], sizes = [8, 128], strides = [1, 1]} : vector<8x512xf32> to vector<8x128xf32>
    %cst_85 = arith.constant 5.000000e-01 : f32
    %314 = vector.broadcast %cst_85 : f32 to vector<8x128xf32>
    %315 = arith.mulf %314, %313 : vector<8x128xf32>
    %316 = math.tanh %315 : vector<8x128xf32>
    %cst_86 = arith.constant 5.000000e-01 : f32
    %317 = vector.broadcast %cst_86 : f32 to vector<8x128xf32>
    %318 = arith.mulf %317, %316 : vector<8x128xf32>
    %cst_87 = arith.constant 5.000000e-01 : f32
    %319 = vector.broadcast %cst_87 : f32 to vector<8x128xf32>
    %320 = arith.addf %318, %319 : vector<8x128xf32>
    %321 = arith.mulf %310, %289 : vector<8x128xf32>
    %322 = arith.mulf %302, %312 : vector<8x128xf32>
    %323 = arith.addf %321, %322 : vector<8x128xf32>
    %324 = math.tanh %323 : vector<8x128xf32>
    %325 = arith.mulf %320, %324 : vector<8x128xf32>
    %c0_88 = arith.constant 0 : index
    %c0_89 = arith.constant 0 : index
    %326 = vector.load %arg5[%c0_88, %c0_89] : memref<128x128xf32, #tpu.memory_space<vmem>>, vector<128x128xf32>
    %cst_90 = arith.constant dense<0.000000e+00> : vector<8x128xf32>
    %327 = tpu.matmul %325, %326, %cst_90 {dimension_numbers = #tpu.dot_dimension_numbers<[1], [0], [0], [1], [0, 0, 1, 1], [], []>} : vector<8x128xf32>, vector<128x128xf32>, vector<8x128xf32> -> vector<8x128xf32>
    %c0_91 = arith.constant 0 : index
    %c0_92 = arith.constant 0 : index
    %328 = vector.load %arg6[%c0_91, %c0_92] : memref<1x128xf32, #tpu.memory_space<vmem>>, vector<1x128xf32>
    %329 = vector.broadcast %328 : vector<1x128xf32> to vector<8x128xf32>
    %330 = arith.addf %327, %329 : vector<8x128xf32>
    %c0_93 = arith.constant 0 : index
    %c0_94 = arith.constant 0 : index
    %331 = vector.load %arg7[%c0_93, %c0_94] : memref<8x128xf32, #tpu.memory_space<vmem>>, vector<8x128xf32>
    tpu.vector_store %arg7[%c0_93, %c0_94], %330 {strides = array<i32>} : memref<8x128xf32, #tpu.memory_space<vmem>>, vector<8x128xf32>,
    return
  }
  func.func @transform_0(%arg0: i32) -> (i32, i32) {
    %c0_i32 = arith.constant 0 : i32
    %c0_i32_0 = arith.constant 0 : i32
    return %arg0, %c0_i32 : i32, i32
  }
  func.func @transform_1(%arg0: i32) -> (i32, i32) {
    %c0_i32 = arith.constant 0 : i32
    %c0_i32_0 = arith.constant 0 : i32
    %c0_i32_1 = arith.constant 0 : i32
    return %c0_i32, %c0_i32_0 : i32, i32
  }
  func.func @transform_2(%arg0: i32) -> (i32, i32) {
    %c0_i32 = arith.constant 0 : i32
    %c0_i32_0 = arith.constant 0 : i32
    %c0_i32_1 = arith.constant 0 : i32
    return %c0_i32, %c0_i32_0 : i32, i32
  }
  func.func @transform_3(%arg0: i32) -> (i32, i32) {
    %c0_i32 = arith.constant 0 : i32
    %c0_i32_0 = arith.constant 0 : i32
    %c0_i32_1 = arith.constant 0 : i32
    return %c0_i32, %c0_i32_0 : i32, i32
  }
  func.func @transform_4(%arg0: i32) -> (i32, i32) {
    %c0_i32 = arith.constant 0 : i32
    %c0_i32_0 = arith.constant 0 : i32
    %c0_i32_1 = arith.constant 0 : i32
    return %c0_i32, %c0_i32_0 : i32, i32
  }
  func.func @transform_5(%arg0: i32) -> (i32, i32) {
    %c0_i32 = arith.constant 0 : i32
    %c0_i32_0 = arith.constant 0 : i32
    %c0_i32_1 = arith.constant 0 : i32
    return %c0_i32, %c0_i32_0 : i32, i32
  }
  func.func @transform_6(%arg0: i32) -> (i32, i32) {
    %c0_i32 = arith.constant 0 : i32
    %c0_i32_0 = arith.constant 0 : i32
    return %arg0, %c0_i32 : i32, i32
  }
}

</mosaic_0001>

<llo_original>
// kernel: rnn_forward.1
$region0: #{rnn_forward.1}
  #allocation0 [shape = 'u32[]', space=smem, size = 0x4, offset = 0x4, fixed_abs, tag = 'smem constant byte address 0x4 - core index']
  #allocation1 [shape = 'u32[144,128]{1,0:T(1,128)}', space=vmem, size = 0x12000, scoped, tag = 'internal scratch']
  %s0 = inlined_call_operand.vmem [shape: f32[8,8], index: 0, kind: input, shape index: {}]
  %s1 = inlined_call_operand.vmem [shape: f32[1,512], index: 1, kind: input, shape index: {}]
  %s2 = inlined_call_operand.vmem [shape: bf16[128,512], index: 2, kind: input, shape index: {}]
  %s3 = inlined_call_operand.vmem [shape: f32[1,512], index: 3, kind: input, shape index: {}]
  %s4 = inlined_call_operand.vmem [shape: f32[128,128], index: 4, kind: input, shape index: {}]
  %s5 = inlined_call_operand.vmem [shape: f32[1,128], index: 5, kind: input, shape index: {}]
  %s6 = inlined_call_operand.vmem [shape: f32[8,128], index: 6, kind: output, shape index: {}]
  %s7 = sld [smem:[#allocation0]]
  $region34: #{rnn_forward.1} parent=0
    _
  %s9 = ssub.s32 1, %s7
  %s10 = scalar_select 0, %s9, %s7
  // Predicated region
  $region2: #{rnn_forward.1} parent=0 // pred_check
    _
  $region3: #{rnn_forward.1} parent=0 // pred_check_branch
    %12 = sbr.rel (0) target = $region5
  $region4: #{rnn_forward.1} parent=0 // pred_region
    _
  $region5: #{rnn_forward.1} parent=0 // pred_fallthru
    _
  // Predicated region
  $region6: #{rnn_forward.1} parent=0 // pred_check
    _
  $region7: #{rnn_forward.1} parent=0 // pred_check_branch
    %14 = sbr.rel (0) target = $region9
  $region8: #{rnn_forward.1} parent=0 // pred_region
    _
  $region9: #{rnn_forward.1} parent=0 // pred_fallthru
    _
  // Predicated region
  $region10: #{rnn_forward.1} parent=0 // pred_check
    _
  $region11: #{rnn_forward.1} parent=0 // pred_check_branch
    %16 = sbr.rel (0) target = $region13
  $region12: #{rnn_forward.1} parent=0 // pred_region
    _
  $region13: #{rnn_forward.1} parent=0 // pred_fallthru
    _
  // Predicated region
  $region14: #{rnn_forward.1} parent=0 // pred_check
    _
  $region15: #{rnn_forward.1} parent=0 // pred_check_branch
    %18 = sbr.rel (0) target = $region17
  $region16: #{rnn_forward.1} parent=0 // pred_region
    _
  $region17: #{rnn_forward.1} parent=0 // pred_fallthru
    _
  // Predicated region
  $region18: #{rnn_forward.1} parent=0 // pred_check
    _
  $region19: #{rnn_forward.1} parent=0 // pred_check_branch
    %20 = sbr.rel (0) target = $region21
  $region20: #{rnn_forward.1} parent=0 // pred_region
    _
  $region21: #{rnn_forward.1} parent=0 // pred_fallthru
    _
  // Predicated region
  $region22: #{rnn_forward.1} parent=0 // pred_check
    _
  $region23: #{rnn_forward.1} parent=0 // pred_check_branch
    %22 = sbr.rel (0) target = $region25
  $region24: #{rnn_forward.1} parent=0 // pred_region
    _
  $region25: #{rnn_forward.1} parent=0 // pred_fallthru
    _
  %v24 = vld [vmem:[%s0] sm:$0xff]
  %v25 = vld [vmem:[%s1] sm:$0xf]
  %v26 = vld [vmem:[%s2] sm:$0xff]
  %v27 = vld [vmem:[%s2 + $0x8] sm:$0xff]
  %v28 = vld [vmem:[%s2 + $0x10] sm:$0xff]
  %v29 = vld [vmem:[%s2 + $0x18] sm:$0xff]
  %v30 = vld [vmem:[%s2 + $0x20] sm:$0xff]
  %v31 = vld [vmem:[%s2 + $0x28] sm:$0xff]
  %v32 = vld [vmem:[%s2 + $0x30] sm:$0xff]
  %v33 = vld [vmem:[%s2 + $0x38] sm:$0xff]
  %v34 = vld [vmem:[%s2 + $0x40] sm:$0xff]
  %v35 = vld [vmem:[%s2 + $0x48] sm:$0xff]
  %v36 = vld [vmem:[%s2 + $0x50] sm:$0xff]
  %v37 = vld [vmem:[%s2 + $0x58] sm:$0xff]
  %v38 = vld [vmem:[%s2 + $0x60] sm:$0xff]
  %v39 = vld [vmem:[%s2 + $0x68] sm:$0xff]
  %v40 = vld [vmem:[%s2 + $0x70] sm:$0xff]
  %v41 = vld [vmem:[%s2 + $0x78] sm:$0xff]
  %v42 = vld [vmem:[%s2 + $0x80] sm:$0xff]
  %v43 = vld [vmem:[%s2 + $0x88] sm:$0xff]
  %v44 = vld [vmem:[%s2 + $0x90] sm:$0xff]
  %v45 = vld [vmem:[%s2 + $0x98] sm:$0xff]
  %v46 = vld [vmem:[%s2 + $0xa0] sm:$0xff]
  %v47 = vld [vmem:[%s2 + $0xa8] sm:$0xff]
  %v48 = vld [vmem:[%s2 + $0xb0] sm:$0xff]
  %v49 = vld [vmem:[%s2 + $0xb8] sm:$0xff]
  %v50 = vld [vmem:[%s2 + $0xc0] sm:$0xff]
  %v51 = vld [vmem:[%s2 + $0xc8] sm:$0xff]
  %v52 = vld [vmem:[%s2 + $0xd0] sm:$0xff]
  %v53 = vld [vmem:[%s2 + $0xd8] sm:$0xff]
  %v54 = vld [vmem:[%s2 + $0xe0] sm:$0xff]
  %v55 = vld [vmem:[%s2 + $0xe8] sm:$0xff]
  %v56 = vld [vmem:[%s2 + $0xf0] sm:$0xff]
  %v57 = vld [vmem:[%s2 + $0xf8] sm:$0xff]
  %v58 = vld [vmem:[%s3] sm:$0xf]
  %60 = vset.pattern.permute.xlu0 0
  %61 = vperm.xlu0 %60, %v24
  %v62 = vpop.permute.xlu0 %61
  %v65 = vlaneseq
  %v66 = vshrl.u32 %v65, 7
  %v67 = vsub.s32 0, %v66
  %v68 = vrot.slane %v25, %v67
  %v69 = vlaneseq
  %v70 = vshrl.u32 %v69, 7
  %v71 = vsub.s32 1, %v70
  %v72 = vrot.slane %v25, %v71
  %v73 = vlaneseq
  %v74 = vshrl.u32 %v73, 7
  %v75 = vsub.s32 2, %v74
  %v76 = vrot.slane %v25, %v75
  %v77 = vlaneseq
  %v78 = vshrl.u32 %v77, 7
  %v79 = vsub.s32 3, %v78
  %v80 = vrot.slane %v25, %v79
  %v85 = vmul.f32 %v62, %v68
  %v86 = vmul.f32 %v62, %v72
  %v87 = vmul.f32 %v62, %v76
  %v88 = vmul.f32 %v62, %v80
  %v90 = vlaneseq
  %v91 = vshrl.u32 %v90, 7
  %v92 = vsub.s32 0, %v91
  %v93 = vrot.slane %v58, %v92
  %v94 = vlaneseq
  %v95 = vshrl.u32 %v94, 7
  %v96 = vsub.s32 1, %v95
  %v97 = vrot.slane %v58, %v96
  %v98 = vlaneseq
  %v99 = vshrl.u32 %v98, 7
  %v100 = vsub.s32 2, %v99
  %v101 = vrot.slane %v58, %v100
  %v102 = vlaneseq
  %v103 = vshrl.u32 %v102, 7
  %v104 = vsub.s32 3, %v103
  %v105 = vrot.slane %v58, %v104
  %v110 = vadd.f32 %v85, %v93
  %v111 = vadd.f32 %v86, %v97
  %v112 = vadd.f32 %v87, %v101
  %v113 = vadd.f32 %v88, %v105
  %114 = vset.pattern.permute.xlu0 1
  %115 = vperm.xlu0 %114, %v24
  %v116 = vpop.permute.xlu0 %115
  %v118 = vmul.f32 %v116, %v68
  %v119 = vmul.f32 %v116, %v72
  %v120 = vmul.f32 %v116, %v76
  %v121 = vmul.f32 %v116, %v80
  %v122 = vadd.f32 %v118, %v93
  %v123 = vadd.f32 %v119, %v97
  %v124 = vadd.f32 %v120, %v101
  %v125 = vadd.f32 %v121, %v105
  %126 = vset.pattern.permute.xlu0 2
  %127 = vperm.xlu0 %126, %v24
  %v128 = vpop.permute.xlu0 %127
  %v130 = vmul.f32 %v128, %v68
  %v131 = vmul.f32 %v128, %v72
  %v132 = vmul.f32 %v128, %v76
  %v133 = vmul.f32 %v128, %v80
  %v134 = vadd.f32 %v130, %v93
  %v135 = vadd.f32 %v131, %v97
  %v136 = vadd.f32 %v132, %v101
  %v137 = vadd.f32 %v133, %v105
  %138 = vset.pattern.permute.xlu0 3
  %139 = vperm.xlu0 %138, %v24
  %v140 = vpop.permute.xlu0 %139
  %v142 = vmul.f32 %v140, %v68
  %v143 = vmul.f32 %v140, %v72
  %v144 = vmul.f32 %v140, %v76
  %v145 = vmul.f32 %v140, %v80
  %v146 = vadd.f32 %v142, %v93
  %v147 = vadd.f32 %v143, %v97
  %v148 = vadd.f32 %v144, %v101
  %v149 = vadd.f32 %v145, %v105
  %150 = vset.pattern.permute.xlu0 4
  %151 = vperm.xlu0 %150, %v24
  %v152 = vpop.permute.xlu0 %151
  %v154 = vmul.f32 %v152, %v68
  %v155 = vmul.f32 %v152, %v72
  %v156 = vmul.f32 %v152, %v76
  %v157 = vmul.f32 %v152, %v80
  %v158 = vadd.f32 %v154, %v93
  %v159 = vadd.f32 %v155, %v97
  %v160 = vadd.f32 %v156, %v101
  %v161 = vadd.f32 %v157, %v105
  %162 = vset.pattern.permute.xlu0 5
  %163 = vperm.xlu0 %162, %v24
  %v164 = vpop.permute.xlu0 %163
  %v166 = vmul.f32 %v164, %v68
  %v167 = vmul.f32 %v164, %v72
  %v168 = vmul.f32 %v164, %v76
  %v169 = vmul.f32 %v164, %v80
  %v170 = vadd.f32 %v166, %v93
  %v171 = vadd.f32 %v167, %v97
  %v172 = vadd.f32 %v168, %v101
  %v173 = vadd.f32 %v169, %v105
  %174 = vset.pattern.permute.xlu0 6
  %175 = vperm.xlu0 %174, %v24
  %v176 = vpop.permute.xlu0 %175
  %v178 = vmul.f32 %v176, %v68
  %v179 = vmul.f32 %v176, %v72
  %v180 = vmul.f32 %v176, %v76
  %v181 = vmul.f32 %v176, %v80
  %v182 = vadd.f32 %v178, %v93
  %v183 = vadd.f32 %v179, %v97
  %v184 = vadd.f32 %v180, %v101
  %v185 = vadd.f32 %v181, %v105
  %186 = vset.pattern.permute.xlu0 7
  %187 = vperm.xlu0 %186, %v24
  %v188 = vpop.permute.xlu0 %187
  %v190 = vmul.f32 %v188, %v68
  %v191 = vmul.f32 %v188, %v72
  %v192 = vmul.f32 %v188, %v76
  %v193 = vmul.f32 %v188, %v80
  %v194 = vadd.f32 %v190, %v93
  %v195 = vadd.f32 %v191, %v97
  %v196 = vadd.f32 %v192, %v101
  %v197 = vadd.f32 %v193, %v105
  %v230 = vunpack.c.l.b16 %v26
  %v231 = vunpack.c.h.b16 %v26
  %v232 = vunpack.c.l.b16 %v27
  %v233 = vunpack.c.h.b16 %v27
  %v234 = vunpack.c.l.b16 %v28
  %v235 = vunpack.c.h.b16 %v28
  %v236 = vunpack.c.l.b16 %v29
  %v237 = vunpack.c.h.b16 %v29
  %v238 = vunpack.c.l.b16 %v30
  %v239 = vunpack.c.h.b16 %v30
  %v240 = vunpack.c.l.b16 %v31
  %v241 = vunpack.c.h.b16 %v31
  %v242 = vunpack.c.l.b16 %v32
  %v243 = vunpack.c.h.b16 %v32
  %v244 = vunpack.c.l.b16 %v33
  %v245 = vunpack.c.h.b16 %v33
  %v246 = vunpack.c.l.b16 %v34
  %v247 = vunpack.c.h.b16 %v34
  %v248 = vunpack.c.l.b16 %v35
  %v249 = vunpack.c.h.b16 %v35
  %v250 = vunpack.c.l.b16 %v36
  %v251 = vunpack.c.h.b16 %v36
  %v252 = vunpack.c.l.b16 %v37
  %v253 = vunpack.c.h.b16 %v37
  %v254 = vunpack.c.l.b16 %v38
  %v255 = vunpack.c.h.b16 %v38
  %v256 = vunpack.c.l.b16 %v39
  %v257 = vunpack.c.h.b16 %v39
  %v258 = vunpack.c.l.b16 %v40
  %v259 = vunpack.c.h.b16 %v40
  %v260 = vunpack.c.l.b16 %v41
  %v261 = vunpack.c.h.b16 %v41
  %v262 = vunpack.c.l.b16 %v42
  %v263 = vunpack.c.h.b16 %v42
  %v264 = vunpack.c.l.b16 %v43
  %v265 = vunpack.c.h.b16 %v43
  %v266 = vunpack.c.l.b16 %v44
  %v267 = vunpack.c.h.b16 %v44
  %v268 = vunpack.c.l.b16 %v45
  %v269 = vunpack.c.h.b16 %v45
  %v270 = vunpack.c.l.b16 %v46
  %v271 = vunpack.c.h.b16 %v46
  %v272 = vunpack.c.l.b16 %v47
  %v273 = vunpack.c.h.b16 %v47
  %v274 = vunpack.c.l.b16 %v48
  %v275 = vunpack.c.h.b16 %v48
  %v276 = vunpack.c.l.b16 %v49
  %v277 = vunpack.c.h.b16 %v49
  %v278 = vunpack.c.l.b16 %v50
  %v279 = vunpack.c.h.b16 %v50
  %v280 = vunpack.c.l.b16 %v51
  %v281 = vunpack.c.h.b16 %v51
  %v282 = vunpack.c.l.b16 %v52
  %v283 = vunpack.c.h.b16 %v52
  %v284 = vunpack.c.l.b16 %v53
  %v285 = vunpack.c.h.b16 %v53
  %v286 = vunpack.c.l.b16 %v54
  %v287 = vunpack.c.h.b16 %v54
  %v288 = vunpack.c.l.b16 %v55
  %v289 = vunpack.c.h.b16 %v55
  %v290 = vunpack.c.l.b16 %v56
  %v291 = vunpack.c.h.b16 %v56
  %v292 = vunpack.c.l.b16 %v57
  %v293 = vunpack.c.h.b16 %v57
  %v294 = vpack.c.b16 %v234, %v230
  %v295 = vpack.c.b16 %v235, %v231
  %v296 = vpack.c.b16 %v236, %v232
  %v297 = vpack.c.b16 %v237, %v233
  %v298 = vpack.c.b16 %v242, %v238
  %v299 = vpack.c.b16 %v243, %v239
  %v300 = vpack.c.b16 %v244, %v240
  %v301 = vpack.c.b16 %v245, %v241
  %v302 = vpack.c.b16 %v250, %v246
  %v303 = vpack.c.b16 %v251, %v247
  %v304 = vpack.c.b16 %v252, %v248
  %v305 = vpack.c.b16 %v253, %v249
  %v306 = vpack.c.b16 %v258, %v254
  %v307 = vpack.c.b16 %v259, %v255
  %v308 = vpack.c.b16 %v260, %v256
  %v309 = vpack.c.b16 %v261, %v257
  %v310 = vpack.c.b16 %v266, %v262
  %v311 = vpack.c.b16 %v267, %v263
  %v312 = vpack.c.b16 %v268, %v264
  %v313 = vpack.c.b16 %v269, %v265
  %v314 = vpack.c.b16 %v274, %v270
  %v315 = vpack.c.b16 %v275, %v271
  %v316 = vpack.c.b16 %v276, %v272
  %v317 = vpack.c.b16 %v277, %v273
  %v318 = vpack.c.b16 %v282, %v278
  %v319 = vpack.c.b16 %v283, %v279
  %v320 = vpack.c.b16 %v284, %v280
  %v321 = vpack.c.b16 %v285, %v281
  %v322 = vpack.c.b16 %v290, %v286
  %v323 = vpack.c.b16 %v291, %v287
  %v324 = vpack.c.b16 %v292, %v288
  %v325 = vpack.c.b16 %v293, %v289
  %358 = vmatprep.subr.bf16.mxu0 %v295
  %359 = vmatpush1.bf16.msra.mxu0 %v294
  %360 = vmatprep.subr.bf16.mxu0 %v299
  %361 = vmatpush1.bf16.msra.mxu0 %v298
  %362 = vmatprep.subr.bf16.mxu0 %v303
  %363 = vmatpush1.bf16.msra.mxu0 %v302
  %364 = vmatprep.subr.bf16.mxu0 %v307
  %365 = vmatpush1.bf16.msra.mxu0 %v306
  %366 = vmatprep.subr.bf16.mxu0 %v311
  %367 = vmatpush1.bf16.msra.mxu0 %v310
  %368 = vmatprep.subr.bf16.mxu0 %v315
  %369 = vmatpush1.bf16.msra.mxu0 %v314
  %370 = vmatprep.subr.bf16.mxu0 %v319
  %371 = vmatpush1.bf16.msra.mxu0 %v318
  %372 = vmatprep.subr.bf16.mxu0 %v323
  %373 = vmatpush1.bf16.msra.mxu0 %v322
  %374 = vmatprep.subr.bf16.mxu0 0
  %375 = vmatpush1.bf16.msra.mxu0 0
  %376 = vmatprep.subr.bf16.mxu0 0
  %377 = vmatpush1.bf16.msra.mxu0 0
  %378 = vmatprep.subr.bf16.mxu0 0
  %379 = vmatpush1.bf16.msra.mxu0 0
  %380 = vmatprep.subr.bf16.mxu0 0
  %381 = vmatpush1.bf16.msra.mxu0 0
  %382 = vmatprep.subr.bf16.mxu0 0
  %383 = vmatpush1.bf16.msra.mxu0 0
  %384 = vmatprep.subr.bf16.mxu0 0
  %385 = vmatpush1.bf16.msra.mxu0 0
  %386 = vmatprep.subr.bf16.mxu0 0
  %387 = vmatpush1.bf16.msra.mxu0 0
  %388 = vmatprep.subr.bf16.mxu0 0
  %389 = vmatpush1.bf16.msra.mxu0 0
  %390 = vmatprep.mubr.bf16.mxu0 0
  %391 = vmatmul.mubr.bf16.gmra.mrb[0].mxu0 0
  %v392 = vpop.f32.mrb[0].mxu0
  %v393 = vadd.f32 0.0, %v392
  %v394 = vpop.f32.mrb[0].mxu0
  %v395 = vadd.f32 0.0, %v394
  %v396 = vpop.f32.mrb[0].mxu0
  %v397 = vpop.f32.mrb[0].mxu0
  %398 = vdwg.mxu0
  %399 = vmatprep.subr.bf16.mxu0 %v297
  %400 = vmatpush1.bf16.msra.mxu0 %v296
  %401 = vmatprep.subr.bf16.mxu0 %v301
  %402 = vmatpush1.bf16.msra.mxu0 %v300
  %403 = vmatprep.subr.bf16.mxu0 %v305
  %404 = vmatpush1.bf16.msra.mxu0 %v304
  %405 = vmatprep.subr.bf16.mxu0 %v309
  %406 = vmatpush1.bf16.msra.mxu0 %v308
  %407 = vmatprep.subr.bf16.mxu0 %v313
  %408 = vmatpush1.bf16.msra.mxu0 %v312
  %409 = vmatprep.subr.bf16.mxu0 %v317
  %410 = vmatpush1.bf16.msra.mxu0 %v316
  %411 = vmatprep.subr.bf16.mxu0 %v321
  %412 = vmatpush1.bf16.msra.mxu0 %v320
  %413 = vmatprep.subr.bf16.mxu0 %v325
  %414 = vmatpush1.bf16.msra.mxu0 %v324
  %415 = vmatprep.subr.bf16.mxu0 0
  %416 = vmatpush1.bf16.msra.mxu0 0
  %417 = vmatprep.subr.bf16.mxu0 0
  %418 = vmatpush1.bf16.msra.mxu0 0
  %419 = vmatprep.subr.bf16.mxu0 0
  %420 = vmatpush1.bf16.msra.mxu0 0
  %421 = vmatprep.subr.bf16.mxu0 0
  %422 = vmatpush1.bf16.msra.mxu0 0
  %423 = vmatprep.subr.bf16.mxu0 0
  %424 = vmatpush1.bf16.msra.mxu0 0
  %425 = vmatprep.subr.bf16.mxu0 0
  %426 = vmatpush1.bf16.msra.mxu0 0
  %427 = vmatprep.subr.bf16.mxu0 0
  %428 = vmatpush1.bf16.msra.mxu0 0
  %429 = vmatprep.subr.bf16.mxu0 0
  %430 = vmatpush1.bf16.msra.mxu0 0
  %431 = vmatprep.mubr.bf16.mxu0 0
  %432 = vmatmul.mubr.bf16.gmra.mrb[0].mxu0 0
  %v433 = vpop.f32.mrb[0].mxu0
  %v434 = vadd.f32 0.0, %v433
  %v435 = vpop.f32.mrb[0].mxu0
  %v436 = vadd.f32 0.0, %v435
  %v437 = vpop.f32.mrb[0].mxu0
  %v438 = vpop.f32.mrb[0].mxu0
  %439 = vdwg.mxu0
  %v440 = vadd.f32 %v110, %v393
  %v441 = vadd.f32 %v111, %v395
  %v442 = vadd.f32 %v112, %v434
  %v443 = vadd.f32 %v113, %v436
  %v444 = vmul.f32 %v440, 0.5
  %v445 = vtanh.pop %v444
  %v446 = vmul.f32 %v445, 0.5
  %v447 = vadd.f32 %v446, 0.5
  %v448 = vmul.f32 %v441, 0.5
  %v449 = vtanh.pop %v448
  %v450 = vmul.f32 %v449, 0.5
  %v451 = vadd.f32 %v450, 0.5
  %v452 = vtanh.pop %v442
  %v453 = vmul.f32 %v443, 0.5
  %v454 = vtanh.pop %v453
  %v455 = vmul.f32 %v454, 0.5
  %v456 = vadd.f32 %v455, 0.5
  %v457 = vmul.f32 %v451, 0.0
  %v458 = vmul.f32 %v447, %v452
  %v459 = vadd.f32 %v457, %v458
  %v460 = vtanh.pop %v459
  %v461 = vmul.f32 %v456, %v460
  %v462 = vpack.c.bf16 %v461, %v461
  %463 = vmatprep.subr.bf16.mxu0 %v295
  %464 = vmatpush1.bf16.msra.mxu0 %v294
  %465 = vmatprep.subr.bf16.mxu0 %v299
  %466 = vmatpush1.bf16.msra.mxu0 %v298
  %467 = vmatprep.subr.bf16.mxu0 %v303
  %468 = vmatpush1.bf16.msra.mxu0 %v302
  %469 = vmatprep.subr.bf16.mxu0 %v307
  %470 = vmatpush1.bf16.msra.mxu0 %v306
  %471 = vmatprep.subr.bf16.mxu0 %v311
  %472 = vmatpush1.bf16.msra.mxu0 %v310
  %473 = vmatprep.subr.bf16.mxu0 %v315
  %474 = vmatpush1.bf16.msra.mxu0 %v314
  %475 = vmatprep.subr.bf16.mxu0 %v319
  %476 = vmatpush1.bf16.msra.mxu0 %v318
  %477 = vmatprep.subr.bf16.mxu0 %v323
  %478 = vmatpush1.bf16.msra.mxu0 %v322
  %479 = vmatprep.subr.bf16.mxu0 0
  %480 = vmatpush1.bf16.msra.mxu0 0
  %481 = vmatprep.subr.bf16.mxu0 0
  %482 = vmatpush1.bf16.msra.mxu0 0
  %483 = vmatprep.subr.bf16.mxu0 0
  %484 = vmatpush1.bf16.msra.mxu0 0
  %485 = vmatprep.subr.bf16.mxu0 0
  %486 = vmatpush1.bf16.msra.mxu0 0
  %487 = vmatprep.subr.bf16.mxu0 0
  %488 = vmatpush1.bf16.msra.mxu0 0
  %489 = vmatprep.subr.bf16.mxu0 0
  %490 = vmatpush1.bf16.msra.mxu0 0
  %491 = vmatprep.subr.bf16.mxu0 0
  %492 = vmatpush1.bf16.msra.mxu0 0
  %493 = vmatprep.subr.bf16.mxu0 0
  %494 = vmatpush1.bf16.msra.mxu0 0
  %495 = vmatprep.mubr.bf16.mxu0 0
  %496 = vmatmul.mubr.bf16.gmra.mrb[0].mxu0 %v462
  %v497 = vpop.f32.mrb[0].mxu0
  %v498 = vadd.f32 0.0, %v497
  %v499 = vpop.f32.mrb[0].mxu0
  %v500 = vadd.f32 0.0, %v499
  %v501 = vpop.f32.mrb[0].mxu0
  %v502 = vpop.f32.mrb[0].mxu0
  %503 = vdwg.mxu0
  %504 = vmatprep.subr.bf16.mxu0 %v297
  %505 = vmatpush1.bf16.msra.mxu0 %v296
  %506 = vmatprep.subr.bf16.mxu0 %v301
  %507 = vmatpush1.bf16.msra.mxu0 %v300
  %508 = vmatprep.subr.bf16.mxu0 %v305
  %509 = vmatpush1.bf16.msra.mxu0 %v304
  %510 = vmatprep.subr.bf16.mxu0 %v309
  %511 = vmatpush1.bf16.msra.mxu0 %v308
  %512 = vmatprep.subr.bf16.mxu0 %v313
  %513 = vmatpush1.bf16.msra.mxu0 %v312
  %514 = vmatprep.subr.bf16.mxu0 %v317
  %515 = vmatpush1.bf16.msra.mxu0 %v316
  %516 = vmatprep.subr.bf16.mxu0 %v321
  %517 = vmatpush1.bf16.msra.mxu0 %v320
  %518 = vmatprep.subr.bf16.mxu0 %v325
  %519 = vmatpush1.bf16.msra.mxu0 %v324
  %520 = vmatprep.subr.bf16.mxu0 0
  %521 = vmatpush1.bf16.msra.mxu0 0
  %522 = vmatprep.subr.bf16.mxu0 0
  %523 = vmatpush1.bf16.msra.mxu0 0
  %524 = vmatprep.subr.bf16.mxu0 0
  %525 = vmatpush1.bf16.msra.mxu0 0
  %526 = vmatprep.subr.bf16.mxu0 0
  %527 = vmatpush1.bf16.msra.mxu0 0
  %528 = vmatprep.subr.bf16.mxu0 0
  %529 = vmatpush1.bf16.msra.mxu0 0
  %530 = vmatprep.subr.bf16.mxu0 0
  %531 = vmatpush1.bf16.msra.mxu0 0
  %532 = vmatprep.subr.bf16.mxu0 0
  %533 = vmatpush1.bf16.msra.mxu0 0
  %534 = vmatprep.subr.bf16.mxu0 0
  %535 = vmatpush1.bf16.msra.mxu0 0
  %536 = vmatprep.mubr.bf16.mxu0 0
  %537 = vmatmul.mubr.bf16.gmra.mrb[0].mxu0 %v462
  %v538 = vpop.f32.mrb[0].mxu0
  %v539 = vadd.f32 0.0, %v538
  %v540 = vpop.f32.mrb[0].mxu0
  %v541 = vadd.f32 0.0, %v540
  %v542 = vpop.f32.mrb[0].mxu0
  %v543 = vpop.f32.mrb[0].mxu0
  %544 = vdwg.mxu0
  %v545 = vadd.f32 %v122, %v498
  %v546 = vadd.f32 %v123, %v500
  %v547 = vadd.f32 %v124, %v539
  %v548 = vadd.f32 %v125, %v541
  %v549 = vmul.f32 %v545, 0.5
  %v550 = vtanh.pop %v549
  %v551 = vmul.f32 %v550, 0.5
  %v552 = vadd.f32 %v551, 0.5
  %v553 = vmul.f32 %v546, 0.5
  %v554 = vtanh.pop %v553
  %v555 = vmul.f32 %v554, 0.5
  %v556 = vadd.f32 %v555, 0.5
  %v557 = vtanh.pop %v547
  %v558 = vmul.f32 %v548, 0.5
  %v559 = vtanh.pop %v558
  %v560 = vmul.f32 %v559, 0.5
  %v561 = vadd.f32 %v560, 0.5
  %v562 = vmul.f32 %v556, %v459
  %v563 = vmul.f32 %v552, %v557
  %v564 = vadd.f32 %v562, %v563
  %v565 = vtanh.pop %v564
  %v566 = vmul.f32 %v561, %v565
  %v567 = vpack.c.bf16 %v566, %v566
  %568 = vmatprep.subr.bf16.mxu0 %v295
  %569 = vmatpush1.bf16.msra.mxu0 %v294
  %570 = vmatprep.subr.bf16.mxu0 %v299
  %571 = vmatpush1.bf16.msra.mxu0 %v298
  %572 = vmatprep.subr.bf16.mxu0 %v303
  %573 = vmatpush1.bf16.msra.mxu0 %v302
  %574 = vmatprep.subr.bf16.mxu0 %v307
  %575 = vmatpush1.bf16.msra.mxu0 %v306
  %576 = vmatprep.subr.bf16.mxu0 %v311
  %577 = vmatpush1.bf16.msra.mxu0 %v310
  %578 = vmatprep.subr.bf16.mxu0 %v315
  %579 = vmatpush1.bf16.msra.mxu0 %v314
  %580 = vmatprep.subr.bf16.mxu0 %v319
  %581 = vmatpush1.bf16.msra.mxu0 %v318
  %582 = vmatprep.subr.bf16.mxu0 %v323
  %583 = vmatpush1.bf16.msra.mxu0 %v322
  %584 = vmatprep.subr.bf16.mxu0 0
  %585 = vmatpush1.bf16.msra.mxu0 0
  %586 = vmatprep.subr.bf16.mxu0 0
  %587 = vmatpush1.bf16.msra.mxu0 0
  %588 = vmatprep.subr.bf16.mxu0 0
  %589 = vmatpush1.bf16.msra.mxu0 0
  %590 = vmatprep.subr.bf16.mxu0 0
  %591 = vmatpush1.bf16.msra.mxu0 0
  %592 = vmatprep.subr.bf16.mxu0 0
  %593 = vmatpush1.bf16.msra.mxu0 0
  %594 = vmatprep.subr.bf16.mxu0 0
  %595 = vmatpush1.bf16.msra.mxu0 0
  %596 = vmatprep.subr.bf16.mxu0 0
  %597 = vmatpush1.bf16.msra.mxu0 0
  %598 = vmatprep.subr.bf16.mxu0 0
  %599 = vmatpush1.bf16.msra.mxu0 0
  %600 = vmatprep.mubr.bf16.mxu0 0
  %601 = vmatmul.mubr.bf16.gmra.mrb[0].mxu0 %v567
  %v602 = vpop.f32.mrb[0].mxu0
  %v603 = vadd.f32 0.0, %v602
  %v604 = vpop.f32.mrb[0].mxu0
  %v605 = vadd.f32 0.0, %v604
  %v606 = vpop.f32.mrb[0].mxu0
  %v607 = vpop.f32.mrb[0].mxu0
  %608 = vdwg.mxu0
  %609 = vmatprep.subr.bf16.mxu0 %v297
  %610 = vmatpush1.bf16.msra.mxu0 %v296
  %611 = vmatprep.subr.bf16.mxu0 %v301
  %612 = vmatpush1.bf16.msra.mxu0 %v300
  %613 = vmatprep.subr.bf16.mxu0 %v305
  %614 = vmatpush1.bf16.msra.mxu0 %v304
  %615 = vmatprep.subr.bf16.mxu0 %v309
  %616 = vmatpush1.bf16.msra.mxu0 %v308
  %617 = vmatprep.subr.bf16.mxu0 %v313
  %618 = vmatpush1.bf16.msra.mxu0 %v312
  %619 = vmatprep.subr.bf16.mxu0 %v317
  %620 = vmatpush1.bf16.msra.mxu0 %v316
  %621 = vmatprep.subr.bf16.mxu0 %v321
  %622 = vmatpush1.bf16.msra.mxu0 %v320
  %623 = vmatprep.subr.bf16.mxu0 %v325
  %624 = vmatpush1.bf16.msra.mxu0 %v324
  %625 = vmatprep.subr.bf16.mxu0 0
  %626 = vmatpush1.bf16.msra.mxu0 0
  %627 = vmatprep.subr.bf16.mxu0 0
  %628 = vmatpush1.bf16.msra.mxu0 0
  %629 = vmatprep.subr.bf16.mxu0 0
  %630 = vmatpush1.bf16.msra.mxu0 0
  %631 = vmatprep.subr.bf16.mxu0 0
  %632 = vmatpush1.bf16.msra.mxu0 0
  %633 = vmatprep.subr.bf16.mxu0 0
  %634 = vmatpush1.bf16.msra.mxu0 0
  %635 = vmatprep.subr.bf16.mxu0 0
  %636 = vmatpush1.bf16.msra.mxu0 0
  %637 = vmatprep.subr.bf16.mxu0 0
  %638 = vmatpush1.bf16.msra.mxu0 0
  %639 = vmatprep.subr.bf16.mxu0 0
  %640 = vmatpush1.bf16.msra.mxu0 0
  %641 = vmatprep.mubr.bf16.mxu0 0
  %642 = vmatmul.mubr.bf16.gmra.mrb[0].mxu0 %v567
  %v643 = vpop.f32.mrb[0].mxu0
  %v644 = vadd.f32 0.0, %v643
  %v645 = vpop.f32.mrb[0].mxu0
  %v646 = vadd.f32 0.0, %v645
  %v647 = vpop.f32.mrb[0].mxu0
  %v648 = vpop.f32.mrb[0].mxu0
  %649 = vdwg.mxu0
  %v650 = vadd.f32 %v134, %v603
  %v651 = vadd.f32 %v135, %v605
  %v652 = vadd.f32 %v136, %v644
  %v653 = vadd.f32 %v137, %v646
  %v654 = vmul.f32 %v650, 0.5
  %v655 = vtanh.pop %v654
  %v656 = vmul.f32 %v655, 0.5
  %v657 = vadd.f32 %v656, 0.5
  %v658 = vmul.f32 %v651, 0.5
  %v659 = vtanh.pop %v658
  %v660 = vmul.f32 %v659, 0.5
  %v661 = vadd.f32 %v660, 0.5
  %v662 = vtanh.pop %v652
  %v663 = vmul.f32 %v653, 0.5
  %v664 = vtanh.pop %v663
  %v665 = vmul.f32 %v664, 0.5
  %v666 = vadd.f32 %v665, 0.5
  %v667 = vmul.f32 %v661, %v564
  %v668 = vmul.f32 %v657, %v662
  %v669 = vadd.f32 %v667, %v668
  %v670 = vtanh.pop %v669
  %v671 = vmul.f32 %v666, %v670
  %v672 = vpack.c.bf16 %v671, %v671
  %673 = vmatprep.subr.bf16.mxu0 %v295
  %674 = vmatpush1.bf16.msra.mxu0 %v294
  %675 = vmatprep.subr.bf16.mxu0 %v299
  %676 = vmatpush1.bf16.msra.mxu0 %v298
  %677 = vmatprep.subr.bf16.mxu0 %v303
  %678 = vmatpush1.bf16.msra.mxu0 %v302
  %679 = vmatprep.subr.bf16.mxu0 %v307
  %680 = vmatpush1.bf16.msra.mxu0 %v306
  %681 = vmatprep.subr.bf16.mxu0 %v311
  %682 = vmatpush1.bf16.msra.mxu0 %v310
  %683 = vmatprep.subr.bf16.mxu0 %v315
  %684 = vmatpush1.bf16.msra.mxu0 %v314
  %685 = vmatprep.subr.bf16.mxu0 %v319
  %686 = vmatpush1.bf16.msra.mxu0 %v318
  %687 = vmatprep.subr.bf16.mxu0 %v323
  %688 = vmatpush1.bf16.msra.mxu0 %v322
  %689 = vmatprep.subr.bf16.mxu0 0
  %690 = vmatpush1.bf16.msra.mxu0 0
  %691 = vmatprep.subr.bf16.mxu0 0
  %692 = vmatpush1.bf16.msra.mxu0 0
  %693 = vmatprep.subr.bf16.mxu0 0
  %694 = vmatpush1.bf16.msra.mxu0 0
  %695 = vmatprep.subr.bf16.mxu0 0
  %696 = vmatpush1.bf16.msra.mxu0 0
  %697 = vmatprep.subr.bf16.mxu0 0
  %698 = vmatpush1.bf16.msra.mxu0 0
  %699 = vmatprep.subr.bf16.mxu0 0
  %700 = vmatpush1.bf16.msra.mxu0 0
  %701 = vmatprep.subr.bf16.mxu0 0
  %702 = vmatpush1.bf16.msra.mxu0 0
  %703 = vmatprep.subr.bf16.mxu0 0
  %704 = vmatpush1.bf16.msra.mxu0 0
  %705 = vmatprep.mubr.bf16.mxu0 0
  %706 = vmatmul.mubr.bf16.gmra.mrb[0].mxu0 %v672
  %v707 = vpop.f32.mrb[0].mxu0
  %v708 = vadd.f32 0.0, %v707
  %v709 = vpop.f32.mrb[0].mxu0
  %v710 = vadd.f32 0.0, %v709
  %v711 = vpop.f32.mrb[0].mxu0
  %v712 = vpop.f32.mrb[0].mxu0
  %713 = vdwg.mxu0
  %714 = vmatprep.subr.bf16.mxu0 %v297
  %715 = vmatpush1.bf16.msra.mxu0 %v296
  %716 = vmatprep.subr.bf16.mxu0 %v301
  %717 = vmatpush1.bf16.msra.mxu0 %v300
  %718 = vmatprep.subr.bf16.mxu0 %v305
  %719 = vmatpush1.bf16.msra.mxu0 %v304
  %720 = vmatprep.subr.bf16.mxu0 %v309
  %721 = vmatpush1.bf16.msra.mxu0 %v308
  %722 = vmatprep.subr.bf16.mxu0 %v313
  %723 = vmatpush1.bf16.msra.mxu0 %v312
  %724 = vmatprep.subr.bf16.mxu0 %v317
  %725 = vmatpush1.bf16.msra.mxu0 %v316
  %726 = vmatprep.subr.bf16.mxu0 %v321
  %727 = vmatpush1.bf16.msra.mxu0 %v320
  %728 = vmatprep.subr.bf16.mxu0 %v325
  %729 = vmatpush1.bf16.msra.mxu0 %v324
  %730 = vmatprep.subr.bf16.mxu0 0
  %731 = vmatpush1.bf16.msra.mxu0 0
  %732 = vmatprep.subr.bf16.mxu0 0
  %733 = vmatpush1.bf16.msra.mxu0 0
  %734 = vmatprep.subr.bf16.mxu0 0
  %735 = vmatpush1.bf16.msra.mxu0 0
  %736 = vmatprep.subr.bf16.mxu0 0
  %737 = vmatpush1.bf16.msra.mxu0 0
  %738 = vmatprep.subr.bf16.mxu0 0
  %739 = vmatpush1.bf16.msra.mxu0 0
  %740 = vmatprep.subr.bf16.mxu0 0
  %741 = vmatpush1.bf16.msra.mxu0 0
  %742 = vmatprep.subr.bf16.mxu0 0
  %743 = vmatpush1.bf16.msra.mxu0 0
  %744 = vmatprep.subr.bf16.mxu0 0
  %745 = vmatpush1.bf16.msra.mxu0 0
  %746 = vmatprep.mubr.bf16.mxu0 0
  %747 = vmatmul.mubr.bf16.gmra.mrb[0].mxu0 %v672
  %v748 = vpop.f32.mrb[0].mxu0
  %v749 = vadd.f32 0.0, %v748
  %v750 = vpop.f32.mrb[0].mxu0
  %v751 = vadd.f32 0.0, %v750
  %v752 = vpop.f32.mrb[0].mxu0
  %v753 = vpop.f32.mrb[0].mxu0
  %754 = vdwg.mxu0
  %v755 = vadd.f32 %v146, %v708
  %v756 = vadd.f32 %v147, %v710
  %v757 = vadd.f32 %v148, %v749
  %v758 = vadd.f32 %v149, %v751
  %v759 = vmul.f32 %v755, 0.5
  %v760 = vtanh.pop %v759
  %v761 = vmul.f32 %v760, 0.5
  %v762 = vadd.f32 %v761, 0.5
  %v763 = vmul.f32 %v756, 0.5
  %v764 = vtanh.pop %v763
  %v765 = vmul.f32 %v764, 0.5
  %v766 = vadd.f32 %v765, 0.5
  %v767 = vtanh.pop %v757
  %v768 = vmul.f32 %v758, 0.5
  %v769 = vtanh.pop %v768
  %v770 = vmul.f32 %v769, 0.5
  %v771 = vadd.f32 %v770, 0.5
  %v772 = vmul.f32 %v766, %v669
  %v773 = vmul.f32 %v762, %v767
  %v774 = vadd.f32 %v772, %v773
  %v775 = vtanh.pop %v774
  %v776 = vmul.f32 %v771, %v775
  %v777 = vpack.c.bf16 %v776, %v776
  %778 = vmatprep.subr.bf16.mxu0 %v295
  %779 = vmatpush1.bf16.msra.mxu0 %v294
  %780 = vmatprep.subr.bf16.mxu0 %v299
  %781 = vmatpush1.bf16.msra.mxu0 %v298
  %782 = vmatprep.subr.bf16.mxu0 %v303
  %783 = vmatpush1.bf16.msra.mxu0 %v302
  %784 = vmatprep.subr.bf16.mxu0 %v307
  %785 = vmatpush1.bf16.msra.mxu0 %v306
  %786 = vmatprep.subr.bf16.mxu0 %v311
  %787 = vmatpush1.bf16.msra.mxu0 %v310
  %788 = vmatprep.subr.bf16.mxu0 %v315
  %789 = vmatpush1.bf16.msra.mxu0 %v314
  %790 = vmatprep.subr.bf16.mxu0 %v319
  %791 = vmatpush1.bf16.msra.mxu0 %v318
  %792 = vmatprep.subr.bf16.mxu0 %v323
  %793 = vmatpush1.bf16.msra.mxu0 %v322
  %794 = vmatprep.subr.bf16.mxu0 0
  %795 = vmatpush1.bf16.msra.mxu0 0
  %796 = vmatprep.subr.bf16.mxu0 0
  %797 = vmatpush1.bf16.msra.mxu0 0
  %798 = vmatprep.subr.bf16.mxu0 0
  %799 = vmatpush1.bf16.msra.mxu0 0
  %800 = vmatprep.subr.bf16.mxu0 0
  %801 = vmatpush1.bf16.msra.mxu0 0
  %802 = vmatprep.subr.bf16.mxu0 0
  %803 = vmatpush1.bf16.msra.mxu0 0
  %804 = vmatprep.subr.bf16.mxu0 0
  %805 = vmatpush1.bf16.msra.mxu0 0
  %806 = vmatprep.subr.bf16.mxu0 0
  %807 = vmatpush1.bf16.msra.mxu0 0
  %808 = vmatprep.subr.bf16.mxu0 0
  %809 = vmatpush1.bf16.msra.mxu0 0
  %810 = vmatprep.mubr.bf16.mxu0 0
  %811 = vmatmul.mubr.bf16.gmra.mrb[0].mxu0 %v777
  %v812 = vpop.f32.mrb[0].mxu0
  %v813 = vadd.f32 0.0, %v812
  %v814 = vpop.f32.mrb[0].mxu0
  %v815 = vadd.f32 0.0, %v814
  %v816 = vpop.f32.mrb[0].mxu0
  %v817 = vpop.f32.mrb[0].mxu0
  %818 = vdwg.mxu0
  %819 = vmatprep.subr.bf16.mxu0 %v297
  %820 = vmatpush1.bf16.msra.mxu0 %v296
  %821 = vmatprep.subr.bf16.mxu0 %v301
  %822 = vmatpush1.bf16.msra.mxu0 %v300
  %823 = vmatprep.subr.bf16.mxu0 %v305
  %824 = vmatpush1.bf16.msra.mxu0 %v304
  %825 = vmatprep.subr.bf16.mxu0 %v309
  %826 = vmatpush1.bf16.msra.mxu0 %v308
  %827 = vmatprep.subr.bf16.mxu0 %v313
  %828 = vmatpush1.bf16.msra.mxu0 %v312
  %829 = vmatprep.subr.bf16.mxu0 %v317
  %830 = vmatpush1.bf16.msra.mxu0 %v316
  %831 = vmatprep.subr.bf16.mxu0 %v321
  %832 = vmatpush1.bf16.msra.mxu0 %v320
  %833 = vmatprep.subr.bf16.mxu0 %v325
  %834 = vmatpush1.bf16.msra.mxu0 %v324
  %835 = vmatprep.subr.bf16.mxu0 0
  %836 = vmatpush1.bf16.msra.mxu0 0
  %837 = vmatprep.subr.bf16.mxu0 0
  %838 = vmatpush1.bf16.msra.mxu0 0
  %839 = vmatprep.subr.bf16.mxu0 0
  %840 = vmatpush1.bf16.msra.mxu0 0
  %841 = vmatprep.subr.bf16.mxu0 0
  %842 = vmatpush1.bf16.msra.mxu0 0
  %843 = vmatprep.subr.bf16.mxu0 0
  %844 = vmatpush1.bf16.msra.mxu0 0
  %845 = vmatprep.subr.bf16.mxu0 0
  %846 = vmatpush1.bf16.msra.mxu0 0
  %847 = vmatprep.subr.bf16.mxu0 0
  %848 = vmatpush1.bf16.msra.mxu0 0
  %849 = vmatprep.subr.bf16.mxu0 0
  %850 = vmatpush1.bf16.msra.mxu0 0
  %851 = vmatprep.mubr.bf16.mxu0 0
  %852 = vmatmul.mubr.bf16.gmra.mrb[0].mxu0 %v777
  %v853 = vpop.f32.mrb[0].mxu0
  %v854 = vadd.f32 0.0, %v853
  %v855 = vpop.f32.mrb[0].mxu0
  %v856 = vadd.f32 0.0, %v855
  %v857 = vpop.f32.mrb[0].mxu0
  %v858 = vpop.f32.mrb[0].mxu0
  %859 = vdwg.mxu0
  %v860 = vadd.f32 %v158, %v813
  %v861 = vadd.f32 %v159, %v815
  %v862 = vadd.f32 %v160, %v854
  %v863 = vadd.f32 %v161, %v856
  %v864 = vmul.f32 %v860, 0.5
  %v865 = vtanh.pop %v864
  %v866 = vmul.f32 %v865, 0.5
  %v867 = vadd.f32 %v866, 0.5
  %v868 = vmul.f32 %v861, 0.5
  %v869 = vtanh.pop %v868
  %v870 = vmul.f32 %v869, 0.5
  %v871 = vadd.f32 %v870, 0.5
  %v872 = vtanh.pop %v862
  %v873 = vmul.f32 %v863, 0.5
  %v874 = vtanh.pop %v873
  %v875 = vmul.f32 %v874, 0.5
  %v876 = vadd.f32 %v875, 0.5
  %v877 = vmul.f32 %v871, %v774
  %v878 = vmul.f32 %v867, %v872
  %v879 = vadd.f32 %v877, %v878
  %v880 = vtanh.pop %v879
  %v881 = vmul.f32 %v876, %v880
  %v882 = vpack.c.bf16 %v881, %v881
  %883 = vmatprep.subr.bf16.mxu0 %v295
  %884 = vmatpush1.bf16.msra.mxu0 %v294
  %885 = vmatprep.subr.bf16.mxu0 %v299
  %886 = vmatpush1.bf16.msra.mxu0 %v298
  %887 = vmatprep.subr.bf16.mxu0 %v303
  %888 = vmatpush1.bf16.msra.mxu0 %v302
  %889 = vmatprep.subr.bf16.mxu0 %v307
  %890 = vmatpush1.bf16.msra.mxu0 %v306
  %891 = vmatprep.subr.bf16.mxu0 %v311
  %892 = vmatpush1.bf16.msra.mxu0 %v310
  %893 = vmatprep.subr.bf16.mxu0 %v315
  %894 = vmatpush1.bf16.msra.mxu0 %v314
  %895 = vmatprep.subr.bf16.mxu0 %v319
  %896 = vmatpush1.bf16.msra.mxu0 %v318
  %897 = vmatprep.subr.bf16.mxu0 %v323
  %898 = vmatpush1.bf16.msra.mxu0 %v322
  %899 = vmatprep.subr.bf16.mxu0 0
  %900 = vmatpush1.bf16.msra.mxu0 0
  %901 = vmatprep.subr.bf16.mxu0 0
  %902 = vmatpush1.bf16.msra.mxu0 0
  %903 = vmatprep.subr.bf16.mxu0 0
  %904 = vmatpush1.bf16.msra.mxu0 0
  %905 = vmatprep.subr.bf16.mxu0 0
  %906 = vmatpush1.bf16.msra.mxu0 0
  %907 = vmatprep.subr.bf16.mxu0 0
  %908 = vmatpush1.bf16.msra.mxu0 0
  %909 = vmatprep.subr.bf16.mxu0 0
  %910 = vmatpush1.bf16.msra.mxu0 0
  %911 = vmatprep.subr.bf16.mxu0 0
  %912 = vmatpush1.bf16.msra.mxu0 0
  %913 = vmatprep.subr.bf16.mxu0 0
  %914 = vmatpush1.bf16.msra.mxu0 0
  %915 = vmatprep.mubr.bf16.mxu0 0
  %916 = vmatmul.mubr.bf16.gmra.mrb[0].mxu0 %v882
  %v917 = vpop.f32.mrb[0].mxu0
  %v918 = vadd.f32 0.0, %v917
  %v919 = vpop.f32.mrb[0].mxu0
  %v920 = vadd.f32 0.0, %v919
  %v921 = vpop.f32.mrb[0].mxu0
  %v922 = vpop.f32.mrb[0].mxu0
  %923 = vdwg.mxu0
  %924 = vmatprep.subr.bf16.mxu0 %v297
  %925 = vmatpush1.bf16.msra.mxu0 %v296
  %926 = vmatprep.subr.bf16.mxu0 %v301
  %927 = vmatpush1.bf16.msra.mxu0 %v300
  %928 = vmatprep.subr.bf16.mxu0 %v305
  %929 = vmatpush1.bf16.msra.mxu0 %v304
  %930 = vmatprep.subr.bf16.mxu0 %v309
  %931 = vmatpush1.bf16.msra.mxu0 %v308
  %932 = vmatprep.subr.bf16.mxu0 %v313
  %933 = vmatpush1.bf16.msra.mxu0 %v312
  %934 = vmatprep.subr.bf16.mxu0 %v317
  %935 = vmatpush1.bf16.msra.mxu0 %v316
  %936 = vmatprep.subr.bf16.mxu0 %v321
  %937 = vmatpush1.bf16.msra.mxu0 %v320
  %938 = vmatprep.subr.bf16.mxu0 %v325
  %939 = vmatpush1.bf16.msra.mxu0 %v324
  %940 = vmatprep.subr.bf16.mxu0 0
  %941 = vmatpush1.bf16.msra.mxu0 0
  %942 = vmatprep.subr.bf16.mxu0 0
  %943 = vmatpush1.bf16.msra.mxu0 0
  %944 = vmatprep.subr.bf16.mxu0 0
  %945 = vmatpush1.bf16.msra.mxu0 0
  %946 = vmatprep.subr.bf16.mxu0 0
  %947 = vmatpush1.bf16.msra.mxu0 0
  %948 = vmatprep.subr.bf16.mxu0 0
  %949 = vmatpush1.bf16.msra.mxu0 0
  %950 = vmatprep.subr.bf16.mxu0 0
  %951 = vmatpush1.bf16.msra.mxu0 0
  %952 = vmatprep.subr.bf16.mxu0 0
  %953 = vmatpush1.bf16.msra.mxu0 0
  %954 = vmatprep.subr.bf16.mxu0 0
  %955 = vmatpush1.bf16.msra.mxu0 0
  %956 = vmatprep.mubr.bf16.mxu0 0
  %957 = vmatmul.mubr.bf16.gmra.mrb[0].mxu0 %v882
  %v958 = vpop.f32.mrb[0].mxu0
  %v959 = vadd.f32 0.0, %v958
  %v960 = vpop.f32.mrb[0].mxu0
  %v961 = vadd.f32 0.0, %v960
  %v962 = vpop.f32.mrb[0].mxu0
  %v963 = vpop.f32.mrb[0].mxu0
  %964 = vdwg.mxu0
  %v965 = vadd.f32 %v170, %v918
  %v966 = vadd.f32 %v171, %v920
  %v967 = vadd.f32 %v172, %v959
  %v968 = vadd.f32 %v173, %v961
  %v969 = vmul.f32 %v965, 0.5
  %v970 = vtanh.pop %v969
  %v971 = vmul.f32 %v970, 0.5
  %v972 = vadd.f32 %v971, 0.5
  %v973 = vmul.f32 %v966, 0.5
  %v974 = vtanh.pop %v973
  %v975 = vmul.f32 %v974, 0.5
  %v976 = vadd.f32 %v975, 0.5
  %v977 = vtanh.pop %v967
  %v978 = vmul.f32 %v968, 0.5
  %v979 = vtanh.pop %v978
  %v980 = vmul.f32 %v979, 0.5
  %v981 = vadd.f32 %v980, 0.5
  %v982 = vmul.f32 %v976, %v879
  %v983 = vmul.f32 %v972, %v977
  %v984 = vadd.f32 %v982, %v983
  %v985 = vtanh.pop %v984
  %v986 = vmul.f32 %v981, %v985
  %v987 = vpack.c.bf16 %v986, %v986
  %988 = vmatprep.subr.bf16.mxu0 %v295
  %989 = vmatpush1.bf16.msra.mxu0 %v294
  %990 = vmatprep.subr.bf16.mxu0 %v299
  %991 = vmatpush1.bf16.msra.mxu0 %v298
  %992 = vmatprep.subr.bf16.mxu0 %v303
  %993 = vmatpush1.bf16.msra.mxu0 %v302
  %994 = vmatprep.subr.bf16.mxu0 %v307
  %995 = vmatpush1.bf16.msra.mxu0 %v306
  %996 = vmatprep.subr.bf16.mxu0 %v311
  %997 = vmatpush1.bf16.msra.mxu0 %v310
  %998 = vmatprep.subr.bf16.mxu0 %v315
  %999 = vmatpush1.bf16.msra.mxu0 %v314
  %1000 = vmatprep.subr.bf16.mxu0 %v319
  %1001 = vmatpush1.bf16.msra.mxu0 %v318
  %1002 = vmatprep.subr.bf16.mxu0 %v323
  %1003 = vmatpush1.bf16.msra.mxu0 %v322
  %1004 = vmatprep.subr.bf16.mxu0 0
  %1005 = vmatpush1.bf16.msra.mxu0 0
  %1006 = vmatprep.subr.bf16.mxu0 0
  %1007 = vmatpush1.bf16.msra.mxu0 0
  %1008 = vmatprep.subr.bf16.mxu0 0
  %1009 = vmatpush1.bf16.msra.mxu0 0
  %1010 = vmatprep.subr.bf16.mxu0 0
  %1011 = vmatpush1.bf16.msra.mxu0 0
  %1012 = vmatprep.subr.bf16.mxu0 0
  %1013 = vmatpush1.bf16.msra.mxu0 0
  %1014 = vmatprep.subr.bf16.mxu0 0
  %1015 = vmatpush1.bf16.msra.mxu0 0
  %1016 = vmatprep.subr.bf16.mxu0 0
  %1017 = vmatpush1.bf16.msra.mxu0 0
  %1018 = vmatprep.subr.bf16.mxu0 0
  %1019 = vmatpush1.bf16.msra.mxu0 0
  %1020 = vmatprep.mubr.bf16.mxu0 0
  %1021 = vmatmul.mubr.bf16.gmra.mrb[0].mxu0 %v987
  %v1022 = vpop.f32.mrb[0].mxu0
  %v1023 = vadd.f32 0.0, %v1022
  %v1024 = vpop.f32.mrb[0].mxu0
  %v1025 = vadd.f32 0.0, %v1024
  %v1026 = vpop.f32.mrb[0].mxu0
  %v1027 = vpop.f32.mrb[0].mxu0
  %1028 = vdwg.mxu0
  %1029 = vmatprep.subr.bf16.mxu0 %v297
  %1030 = vmatpush1.bf16.msra.mxu0 %v296
  %1031 = vmatprep.subr.bf16.mxu0 %v301
  %1032 = vmatpush1.bf16.msra.mxu0 %v300
  %1033 = vmatprep.subr.bf16.mxu0 %v305
  %1034 = vmatpush1.bf16.msra.mxu0 %v304
  %1035 = vmatprep.subr.bf16.mxu0 %v309
  %1036 = vmatpush1.bf16.msra.mxu0 %v308
  %1037 = vmatprep.subr.bf16.mxu0 %v313
  %1038 = vmatpush1.bf16.msra.mxu0 %v312
  %1039 = vmatprep.subr.bf16.mxu0 %v317
  %1040 = vmatpush1.bf16.msra.mxu0 %v316
  %1041 = vmatprep.subr.bf16.mxu0 %v321
  %1042 = vmatpush1.bf16.msra.mxu0 %v320
  %1043 = vmatprep.subr.bf16.mxu0 %v325
  %1044 = vmatpush1.bf16.msra.mxu0 %v324
  %1045 = vmatprep.subr.bf16.mxu0 0
  %1046 = vmatpush1.bf16.msra.mxu0 0
  %1047 = vmatprep.subr.bf16.mxu0 0
  %1048 = vmatpush1.bf16.msra.mxu0 0
  %1049 = vmatprep.subr.bf16.mxu0 0
  %1050 = vmatpush1.bf16.msra.mxu0 0
  %1051 = vmatprep.subr.bf16.mxu0 0
  %1052 = vmatpush1.bf16.msra.mxu0 0
  %1053 = vmatprep.subr.bf16.mxu0 0
  %1054 = vmatpush1.bf16.msra.mxu0 0
  %1055 = vmatprep.subr.bf16.mxu0 0
  %1056 = vmatpush1.bf16.msra.mxu0 0
  %1057 = vmatprep.subr.bf16.mxu0 0
  %1058 = vmatpush1.bf16.msra.mxu0 0
  %1059 = vmatprep.subr.bf16.mxu0 0
  %1060 = vmatpush1.bf16.msra.mxu0 0
  %1061 = vmatprep.mubr.bf16.mxu0 0
  %1062 = vmatmul.mubr.bf16.gmra.mrb[0].mxu0 %v987
  %v1063 = vpop.f32.mrb[0].mxu0
  %v1064 = vadd.f32 0.0, %v1063
  %v1065 = vpop.f32.mrb[0].mxu0
  %v1066 = vadd.f32 0.0, %v1065
  %v1067 = vpop.f32.mrb[0].mxu0
  %v1068 = vpop.f32.mrb[0].mxu0
  %1069 = vdwg.mxu0
  %v1070 = vadd.f32 %v182, %v1023
  %v1071 = vadd.f32 %v183, %v1025
  %v1072 = vadd.f32 %v184, %v1064
  %v1073 = vadd.f32 %v185, %v1066
  %v1074 = vmul.f32 %v1070, 0.5
  %v1075 = vtanh.pop %v1074
  %v1076 = vmul.f32 %v1075, 0.5
  %v1077 = vadd.f32 %v1076, 0.5
  %v1078 = vmul.f32 %v1071, 0.5
  %v1079 = vtanh.pop %v1078
  %v1080 = vmul.f32 %v1079, 0.5
  %v1081 = vadd.f32 %v1080, 0.5
  %v1082 = vtanh.pop %v1072
  %v1083 = vmul.f32 %v1073, 0.5
  %v1084 = vtanh.pop %v1083
  %v1085 = vmul.f32 %v1084, 0.5
  %v1086 = vadd.f32 %v1085, 0.5
  %v1087 = vmul.f32 %v1081, %v984
  %v1088 = vmul.f32 %v1077, %v1082
  %v1089 = vadd.f32 %v1087, %v1088
  %v1090 = vtanh.pop %v1089
  %v1091 = vmul.f32 %v1086, %v1090
  %v1092 = vpack.c.bf16 %v1091, %v1091
  %1093 = vmatprep.subr.bf16.mxu0 %v295
  %1094 = vmatpush1.bf16.msra.mxu0 %v294
  %1095 = vmatprep.subr.bf16.mxu0 %v299
  %1096 = vmatpush1.bf16.msra.mxu0 %v298
  %1097 = vmatprep.subr.bf16.mxu0 %v303
  %1098 = vmatpush1.bf16.msra.mxu0 %v302
  %1099 = vmatprep.subr.bf16.mxu0 %v307
  %1100 = vmatpush1.bf16.msra.mxu0 %v306
  %1101 = vmatprep.subr.bf16.mxu0 %v311
  %1102 = vmatpush1.bf16.msra.mxu0 %v310
  %1103 = vmatprep.subr.bf16.mxu0 %v315
  %1104 = vmatpush1.bf16.msra.mxu0 %v314
  %1105 = vmatprep.subr.bf16.mxu0 %v319
  %1106 = vmatpush1.bf16.msra.mxu0 %v318
  %1107 = vmatprep.subr.bf16.mxu0 %v323
  %1108 = vmatpush1.bf16.msra.mxu0 %v322
  %1109 = vmatprep.subr.bf16.mxu0 0
  %1110 = vmatpush1.bf16.msra.mxu0 0
  %1111 = vmatprep.subr.bf16.mxu0 0
  %1112 = vmatpush1.bf16.msra.mxu0 0
  %1113 = vmatprep.subr.bf16.mxu0 0
  %1114 = vmatpush1.bf16.msra.mxu0 0
  %1115 = vmatprep.subr.bf16.mxu0 0
  %1116 = vmatpush1.bf16.msra.mxu0 0
  %1117 = vmatprep.subr.bf16.mxu0 0
  %1118 = vmatpush1.bf16.msra.mxu0 0
  %1119 = vmatprep.subr.bf16.mxu0 0
  %1120 = vmatpush1.bf16.msra.mxu0 0
  %1121 = vmatprep.subr.bf16.mxu0 0
  %1122 = vmatpush1.bf16.msra.mxu0 0
  %1123 = vmatprep.subr.bf16.mxu0 0
  %1124 = vmatpush1.bf16.msra.mxu0 0
  %1125 = vmatprep.mubr.bf16.mxu0 0
  %1126 = vmatmul.mubr.bf16.gmra.mrb[0].mxu0 %v1092
  %v1127 = vpop.f32.mrb[0].mxu0
  %v1128 = vadd.f32 0.0, %v1127
  %v1129 = vpop.f32.mrb[0].mxu0
  %v1130 = vadd.f32 0.0, %v1129
  %v1131 = vpop.f32.mrb[0].mxu0
  %v1132 = vpop.f32.mrb[0].mxu0
  %1133 = vdwg.mxu0
  %1134 = vmatprep.subr.bf16.mxu0 %v297
  %1135 = vmatpush1.bf16.msra.mxu0 %v296
  %1136 = vmatprep.subr.bf16.mxu0 %v301
  %1137 = vmatpush1.bf16.msra.mxu0 %v300
  %1138 = vmatprep.subr.bf16.mxu0 %v305
  %1139 = vmatpush1.bf16.msra.mxu0 %v304
  %1140 = vmatprep.subr.bf16.mxu0 %v309
  %1141 = vmatpush1.bf16.msra.mxu0 %v308
  %1142 = vmatprep.subr.bf16.mxu0 %v313
  %1143 = vmatpush1.bf16.msra.mxu0 %v312
  %1144 = vmatprep.subr.bf16.mxu0 %v317
  %1145 = vmatpush1.bf16.msra.mxu0 %v316
  %1146 = vmatprep.subr.bf16.mxu0 %v321
  %1147 = vmatpush1.bf16.msra.mxu0 %v320
  %1148 = vmatprep.subr.bf16.mxu0 %v325
  %1149 = vmatpush1.bf16.msra.mxu0 %v324
  %1150 = vmatprep.subr.bf16.mxu0 0
  %1151 = vmatpush1.bf16.msra.mxu0 0
  %1152 = vmatprep.subr.bf16.mxu0 0
  %1153 = vmatpush1.bf16.msra.mxu0 0
  %1154 = vmatprep.subr.bf16.mxu0 0
  %1155 = vmatpush1.bf16.msra.mxu0 0
  %1156 = vmatprep.subr.bf16.mxu0 0
  %1157 = vmatpush1.bf16.msra.mxu0 0
  %1158 = vmatprep.subr.bf16.mxu0 0
  %1159 = vmatpush1.bf16.msra.mxu0 0
  %1160 = vmatprep.subr.bf16.mxu0 0
  %1161 = vmatpush1.bf16.msra.mxu0 0
  %1162 = vmatprep.subr.bf16.mxu0 0
  %1163 = vmatpush1.bf16.msra.mxu0 0
  %1164 = vmatprep.subr.bf16.mxu0 0
  %1165 = vmatpush1.bf16.msra.mxu0 0
  %1166 = vmatprep.mubr.bf16.mxu0 0
  %1167 = vmatmul.mubr.bf16.gmra.mrb[0].mxu0 %v1092
  %v1168 = vpop.f32.mrb[0].mxu0
  %v1169 = vadd.f32 0.0, %v1168
  %v1170 = vpop.f32.mrb[0].mxu0
  %v1171 = vadd.f32 0.0, %v1170
  %v1172 = vpop.f32.mrb[0].mxu0
  %v1173 = vpop.f32.mrb[0].mxu0
  %1174 = vdwg.mxu0
  %v1175 = vadd.f32 %v194, %v1128
  %v1176 = vadd.f32 %v195, %v1130
  %v1177 = vadd.f32 %v196, %v1169
  %v1178 = vadd.f32 %v197, %v1171
  %v1179 = vmul.f32 %v1175, 0.5
  %v1180 = vtanh.pop %v1179
  %v1181 = vmul.f32 %v1180, 0.5
  %v1182 = vadd.f32 %v1181, 0.5
  %v1183 = vmul.f32 %v1176, 0.5
  %v1184 = vtanh.pop %v1183
  %v1185 = vmul.f32 %v1184, 0.5
  %v1186 = vadd.f32 %v1185, 0.5
  %v1187 = vtanh.pop %v1177
  %v1188 = vmul.f32 %v1178, 0.5
  %v1189 = vtanh.pop %v1188
  %v1190 = vmul.f32 %v1189, 0.5
  %v1191 = vadd.f32 %v1190, 0.5
  %v1192 = vmul.f32 %v1186, %v1089
  %v1193 = vmul.f32 %v1182, %v1187
  %v1194 = vadd.f32 %v1192, %v1193
  %v1195 = vtanh.pop %v1194
  %v1196 = vmul.f32 %v1191, %v1195
  %v1197 = vld [vmem:[%s4] sm:$0xff]
  %v1198 = vld [vmem:[%s4 + $0x8] sm:$0xff]
  %v1199 = vld [vmem:[%s4 + $0x10] sm:$0xff]
  %v1200 = vld [vmem:[%s4 + $0x18] sm:$0xff]
  %v1201 = vld [vmem:[%s4 + $0x20] sm:$0xff]
  %v1202 = vld [vmem:[%s4 + $0x28] sm:$0xff]
  %v1203 = vld [vmem:[%s4 + $0x30] sm:$0xff]
  %v1204 = vld [vmem:[%s4 + $0x38] sm:$0xff]
  %v1205 = vld [vmem:[%s4 + $0x40] sm:$0xff]
  %v1206 = vld [vmem:[%s4 + $0x48] sm:$0xff]
  %v1207 = vld [vmem:[%s4 + $0x50] sm:$0xff]
  %v1208 = vld [vmem:[%s4 + $0x58] sm:$0xff]
  %v1209 = vld [vmem:[%s4 + $0x60] sm:$0xff]
  %v1210 = vld [vmem:[%s4 + $0x68] sm:$0xff]
  %v1211 = vld [vmem:[%s4 + $0x70] sm:$0xff]
  %v1212 = vld [vmem:[%s4 + $0x78] sm:$0xff]
  %v1213 = vld [vmem:[%s5] sm:$0x1]
  %v1215 = vlaneseq
  %v1216 = vshrl.u32 %v1215, 7
  %v1217 = vsub.s32 0, %v1216
  %v1218 = vrot.slane %v1213, %v1217
  %1220 = vmatprep.subr.mxu0 0.0
  %1221 = vmatpush1.msra.mxu0 %v1197
  %1222 = vmatprep.subr.mxu0 0.0
  %1223 = vmatpush1.msra.mxu0 %v1198
  %1224 = vmatprep.subr.mxu0 0.0
  %1225 = vmatpush1.msra.mxu0 %v1199
  %1226 = vmatprep.subr.mxu0 0.0
  %1227 = vmatpush1.msra.mxu0 %v1200
  %1228 = vmatprep.subr.mxu0 0.0
  %1229 = vmatpush1.msra.mxu0 %v1201
  %1230 = vmatprep.subr.mxu0 0.0
  %1231 = vmatpush1.msra.mxu0 %v1202
  %1232 = vmatprep.subr.mxu0 0.0
  %1233 = vmatpush1.msra.mxu0 %v1203
  %1234 = vmatprep.subr.mxu0 0.0
  %1235 = vmatpush1.msra.mxu0 %v1204
  %1236 = vmatprep.subr.mxu0 0.0
  %1237 = vmatpush1.msra.mxu0 %v1205
  %1238 = vmatprep.subr.mxu0 0.0
  %1239 = vmatpush1.msra.mxu0 %v1206
  %1240 = vmatprep.subr.mxu0 0.0
  %1241 = vmatpush1.msra.mxu0 %v1207
  %1242 = vmatprep.subr.mxu0 0.0
  %1243 = vmatpush1.msra.mxu0 %v1208
  %1244 = vmatprep.subr.mxu0 0.0
  %1245 = vmatpush1.msra.mxu0 %v1209
  %1246 = vmatprep.subr.mxu0 0.0
  %1247 = vmatpush1.msra.mxu0 %v1210
  %1248 = vmatprep.subr.mxu0 0.0
  %1249 = vmatpush1.msra.mxu0 %v1211
  %1250 = vmatprep.subr.mxu0 0.0
  %1251 = vmatpush1.msra.mxu0 %v1212
  %1252 = vmatprep.subr.mxu0 0.0
  %1253 = vmatpush1.msra.mxu0 0.0
  %1254 = vmatprep.subr.mxu0 0.0
  %1255 = vmatpush1.msra.mxu0 0.0
  %1256 = vmatprep.subr.mxu0 0.0
  %1257 = vmatpush1.msra.mxu0 0.0
  %1258 = vmatprep.subr.mxu0 0.0
  %1259 = vmatpush1.msra.mxu0 0.0
  %1260 = vmatprep.subr.mxu0 0.0
  %1261 = vmatpush1.msra.mxu0 0.0
  %1262 = vmatprep.subr.mxu0 0.0
  %1263 = vmatpush1.msra.mxu0 0.0
  %1264 = vmatprep.subr.mxu0 0.0
  %1265 = vmatpush1.msra.mxu0 0.0
  %1266 = vmatprep.subr.mxu0 0.0
  %1267 = vmatpush1.msra.mxu0 0.0
  %1268 = vmatprep.subr.mxu0 0.0
  %1269 = vmatpush1.msra.mxu0 0.0
  %1270 = vmatprep.subr.mxu0 0.0
  %1271 = vmatpush1.msra.mxu0 0.0
  %1272 = vmatprep.subr.mxu0 0.0
  %1273 = vmatpush1.msra.mxu0 0.0
  %1274 = vmatprep.subr.mxu0 0.0
  %1275 = vmatpush1.msra.mxu0 0.0
  %1276 = vmatprep.subr.mxu0 0.0
  %1277 = vmatpush1.msra.mxu0 0.0
  %1278 = vmatprep.subr.mxu0 0.0
  %1279 = vmatpush1.msra.mxu0 0.0
  %1280 = vmatprep.subr.mxu0 0.0
  %1281 = vmatpush1.msra.mxu0 0.0
  %1282 = vmatprep.subr.mxu0 0.0
  %1283 = vmatpush1.msra.mxu0 0.0
  %1284 = vmatprep.mubr.f32.mxu0 0.0
  %1285 = vmatmul.mubr.f32.gmra.mrb[0].mxu0 %v1196
  %v1286 = vpop.f32.mrb[0].mxu0
  %v1287 = vadd.f32 %v1218, %v1286
  %v1288 = vpop.f32.mrb[0].mxu0
  %1289 = vdwg.mxu0
  %1290 = vst [vmem:[%s6] sm:$0xff] %v1287
  // Predicated region
  $region26: #{rnn_forward.1} parent=0 // pred_check
    _
  $region27: #{rnn_forward.1} parent=0 // pred_check_branch
    %1292 = sbr.rel (0) target = $region29
  $region28: #{rnn_forward.1} parent=0 // pred_region
    _
  $region29: #{rnn_forward.1} parent=0 // pred_fallthru
    _
  // Predicated region
  $region30: #{rnn_forward.1} parent=0 // pred_check
    _
  $region31: #{rnn_forward.1} parent=0 // pred_check_branch
    %1294 = sbr.rel (0) target = $region33
  $region32: #{rnn_forward.1} parent=0 // pred_region
    _
  $region33: #{rnn_forward.1} parent=0 // pred_fallthru
    _

</llo_original>
